<compile_context>
chip_gen: v5e
topology: v5e:2x2
jax: 0.10.0
libtpu: 0.0.40
codegen_flags: <defaults>
</compile_context>

<pallas_src>
import jax
import jax.numpy as jnp
from jax.experimental import pallas as pl
from jax.experimental.pallas import tpu as pltpu

COMPUTE_DTYPE = jnp.bfloat16   # MXU operand / activation-carry dtype (f32 accum)


def _round_up(x, m):
    return (x + m - 1) // m * m


def _pick_tm(mp, target=512):
    """M-tile that divides mp (a multiple of 8), is a multiple of 8, <= target,
    and gives >= 2 tiles whenever mp > 8 (both v7x TensorCores get a block)."""
    if mp <= 8:
        return mp
    cap = min(target, mp // 2)
    cap = max(8, (cap // 8) * 8)
    for cand in range(cap, 7, -8):
        if mp % cand == 0:
            return cand
    return mp


# ---------------------------------------------------------------------------
# Fused Pallas kernel:  out = relu(A @ W + bias)   (BN scale pre-folded into W)
# M-only grid; W and bias are VMEM-resident, only A streams.
# ---------------------------------------------------------------------------
def _matmul_bias_relu_kernel(a_ref, w_ref, b_ref, o_ref):
    acc = jnp.dot(a_ref[...], w_ref[...], preferred_element_type=jnp.float32)
    o_ref[...] = jnp.maximum(acc + b_ref[...], 0.0).astype(o_ref.dtype)


def fused_matmul_bias_relu(a, w_p, b_p, n_out, *, target_tm=512,
                           out_dtype=COMPUTE_DTYPE):
    """relu(a @ w + b) as a Pallas TPU kernel with an M-only grid.

    a    : [M, K]   activations (cast to bf16 here; K is NOT padded).
    w_p  : [K, Np]  bf16 weights, BN scale folded, Np multiple of 128 (offline).
    b_p  : [1, Np]  f32 bias, padded offline.
    n_out: true number of output columns (<= Np).
    """
    M, K = a.shape
    Kw, Np = w_p.shape
    assert K == Kw and Np % 128 == 0

    a = a.astype(COMPUTE_DTYPE)
    Mp = _round_up(M, 8)
    if Mp != M:                               # never taken at the test shapes
        a = jnp.pad(a, ((0, Mp - M), (0, 0)))
    tm = _pick_tm(Mp, target_tm)

    # Honest VMEM budget: resident W + bias + double-buffered A / out tiles
    # (lane/sublane padded), with 4x headroom, capped well under v7x's 64 MiB.
    lane_k = _round_up(K, 128)
    vmem_est = (_round_up(K, 16) * Np * 2          # resident W (bf16)
                + 8 * Np * 4                        # bias (f32, sublane padded)
                + 2 * tm * lane_k * 2               # A tiles, double-buffered
                + 2 * tm * Np * 2)                  # out tiles, double-buffered
    vmem_limit = int(min(max(4 * vmem_est, 2 * 1024 * 1024), 32 * 1024 * 1024))

    cost = pl.CostEstimate(
        flops=2 * Mp * K * Np,
        transcendentals=0,
        bytes_accessed=(Mp * K + K * Np + Mp * Np) * 2 + Np * 4,
    )

    out = pl.pallas_call(
        _matmul_bias_relu_kernel,
        out_shape=jax.ShapeDtypeStruct((Mp, Np), out_dtype),
        grid=(Mp // tm,),
        in_specs=[
            # Tuning knob (review): pipeline_mode=pl.Buffered(3) on this spec
            # deepens the A stream; left at default depth for portability.
            pl.BlockSpec((tm, K), lambda i: (i, 0)),     # streamed A rows
            pl.BlockSpec((K, Np), lambda i: (0, 0)),     # VMEM-resident weight
            pl.BlockSpec((1, Np), lambda i: (0, 0)),     # VMEM-resident bias
        ],
        out_specs=pl.BlockSpec((tm, Np), lambda i: (i, 0)),
        compiler_params=pltpu.CompilerParams(
            dimension_semantics=("parallel",),
            vmem_limit_bytes=vmem_limit,
        ),
        cost_estimate=cost,
    )(a, w_p, b_p)

    if Mp != M:
        out = out[:M]
    if Np != n_out:
        out = out[:, :n_out]
    return out


# ---------------------------------------------------------------------------
# Glue: im2col / layer wrappers (plain JAX reshapes & slices)
# ---------------------------------------------------------------------------
def im2col(x, ksize, stride, pad):
    # x: NHWC -> cols [N*Ho*Wo, ksize*ksize*C], column order = (dy, dx, cin)
    N, H, W, C = x.shape
    xp = jnp.pad(x, ((0, 0), (pad, pad), (pad, pad), (0, 0)))
    Ho = (H + 2 * pad - ksize) // stride + 1
    Wo = (W + 2 * pad - ksize) // stride + 1
    patches = []
    for dy in range(ksize):
        for dx in range(ksize):
            patches.append(
                xp[:, dy:dy + Ho * stride:stride, dx:dx + Wo * stride:stride, :])
    cols = jnp.stack(patches, axis=3)                 # (N, Ho, Wo, k*k, C)
    return cols.reshape(N * Ho * Wo, ksize * ksize * C), (N, Ho, Wo)


def conv_bn_relu(x, layer, *, stride, pad):
    cout = layer["w_hwio"].shape[-1]                  # static under jit
    cols, (N, Ho, Wo) = im2col(x, 3, stride, pad)
    y = fused_matmul_bias_relu(cols, layer["wmat_p"], layer["bias_p"], cout)
    return y.reshape(N, Ho, Wo, cout)


def deconv_bn_relu(x, layer):
    # ConvTranspose2d kernel=2, stride=2 -> per-pixel matmul + pixel shuffle.
    cout = layer["w_iohw"].shape[1]
    N, H, W, Cin = x.shape
    a = x.reshape(N * H * W, Cin)
    y = fused_matmul_bias_relu(a, layer["wmat_p"], layer["bias_p"], 4 * cout)
    y = y.reshape(N, H, W, 2, 2, cout)                # columns are (kh, kw, co)
    y = jnp.transpose(y, (0, 1, 3, 2, 4, 5))          # (N, H, kh, W, kw, Cout)
    return y.reshape(N, 2 * H, 2 * W, cout)


# ---------------------------------------------------------------------------
# Parameters: deterministic init (mirrors module __init__ shapes) + OFFLINE
# BatchNorm folding, bf16 cast and lane-dense (Np = mult. of 128) padding.
# ---------------------------------------------------------------------------
def _fold_bn(gamma, beta, mean, var, eps=1e-3):       # eps matches the module
    scale = gamma / jnp.sqrt(var + eps)
    bias = beta - mean * scale
    return scale, bias


def _rand_bn(key, c):
    k1, k2, k3, k4 = jax.random.split(key, 4)
    gamma = 1.0 + 0.1 * jax.random.normal(k1, (c,), jnp.float32)
    beta = 0.05 * jax.random.normal(k2, (c,), jnp.float32)
    mean = 0.05 * jax.random.normal(k3, (c,), jnp.float32)
    var = 1.0 + 0.1 * jax.random.uniform(k4, (c,), jnp.float32)
    return gamma, beta, mean, var


def init_raw_params(key, input_dim, layer_num):
    raw = {"encoder": [], "decoder": []}
    c = input_dim
    for _ in range(layer_num):
        key, k0, k1, k2, k3 = jax.random.split(key, 5)
        conv1 = jax.random.normal(k0, (c, c, 3, 3), jnp.float32) / (3.0 * jnp.sqrt(c))
        bn1 = _rand_bn(k1, c)
        conv2 = jax.random.normal(k2, (2 * c, c, 3, 3), jnp.float32) / (3.0 * jnp.sqrt(c))
        bn2 = _rand_bn(k3, 2 * c)
        raw["encoder"].append((conv1, bn1, conv2, bn2))
        c *= 2
    c = input_dim
    for _ in range(layer_num):
        key, k0, k1, k2, k3 = jax.random.split(key, 5)
        deconv = jax.random.normal(k0, (2 * c, c, 2, 2), jnp.float32) / (2.0 * jnp.sqrt(c))
        bn1 = _rand_bn(k1, c)
        conv = jax.random.normal(k2, (c, c, 3, 3), jnp.float32) / (3.0 * jnp.sqrt(c))
        bn2 = _rand_bn(k3, c)
        raw["decoder"].append((deconv, bn1, conv, bn2))
        c *= 2
    return raw


def _pad_cast(wmat, bias):
    """Pad N to a 128 multiple (lane-dense kernel output), cast W to bf16."""
    K, n = wmat.shape
    Np = _round_up(n, 128)
    w_p = jnp.zeros((K, Np), COMPUTE_DTYPE).at[:, :n].set(wmat.astype(COMPUTE_DTYPE))
    b_p = jnp.zeros((1, Np), jnp.float32).at[0, :n].set(bias.astype(jnp.float32))
    return w_p, b_p


def _prep_conv(w_oihw, bn):
    scale, bias = _fold_bn(*bn)
    wf = w_oihw * scale[:, None, None, None]          # fold BN scale offline
    cout, cin, kh, kw = wf.shape
    w_hwio = jnp.transpose(wf, (2, 3, 1, 0))          # (kh, kw, cin, cout)
    wmat = w_hwio.reshape(kh * kw * cin, cout)        # rows ordered (dy, dx, cin)
    wmat_p, bias_p = _pad_cast(wmat, bias)
    return {"w_hwio": w_hwio, "bias": bias,           # for the pure-JAX reference
            "wmat_p": wmat_p, "bias_p": bias_p}       # padded/cast kernel operands


def _prep_deconv(w_iohw, bn):
    scale, bias = _fold_bn(*bn)
    wf = w_iohw * scale[None, :, None, None]          # fold BN scale offline
    cin, cout, kh, kw = wf.shape
    wmat = jnp.transpose(wf, (0, 2, 3, 1)).reshape(cin, kh * kw * cout)
    bias4 = jnp.tile(bias, kh * kw)                   # matches (kh, kw, co) columns
    wmat_p, bias_p = _pad_cast(wmat, bias4)
    return {"w_iohw": wf, "bias": bias,               # for the pure-JAX reference
            "wmat_p": wmat_p, "bias_p": bias_p}


def prepare_params(raw):
    params = {"encoder": [], "decoder": []}
    for conv1, bn1, conv2, bn2 in raw["encoder"]:
        params["encoder"].append((_prep_conv(conv1, bn1), _prep_conv(conv2, bn2)))
    for deconv, bn1, conv, bn2 in raw["decoder"]:
        params["decoder"].append((_prep_deconv(deconv, bn1), _prep_conv(conv, bn2)))
    return params


# ---------------------------------------------------------------------------
# Forward (Pallas path)
# ---------------------------------------------------------------------------
@jax.jit
def encoder_decoder_forward(x_nchw, params):
    x = jnp.transpose(x_nchw, (0, 2, 3, 1)).astype(COMPUTE_DTYPE)   # NCHW -> NHWC
    for l1, l2 in params["encoder"]:
        x = conv_bn_relu(x, l1, stride=2, pad=1)      # ZeroPad2d(1) + Conv(s=2, p=0)
        x = conv_bn_relu(x, l2, stride=1, pad=1)
    for ld, lc in reversed(params["decoder"]):        # decoder applied in reverse
        x = deconv_bn_relu(x, ld)
        x = conv_bn_relu(x, lc, stride=1, pad=1)
    return jnp.transpose(x, (0, 3, 1, 2)).astype(jnp.float32)       # NHWC -> NCHW


# ---------------------------------------------------------------------------
# Pure-JAX reference (same folded bf16 weights) for correctness check
# ---------------------------------------------------------------------------
def _ref_conv(x, layer, stride, pad):
    y = jax.lax.conv_general_dilated(
        x.astype(COMPUTE_DTYPE), layer["w_hwio"].astype(COMPUTE_DTYPE),
        window_strides=(stride, stride), padding=[(pad, pad), (pad, pad)],
        dimension_numbers=("NHWC", "HWIO", "NHWC"),
        preferred_element_type=jnp.float32)
    y = jnp.maximum(y + layer["bias"].astype(jnp.float32), 0.0)
    return y.astype(COMPUTE_DTYPE)


def _ref_deconv(x, layer):
    N, H, W, _ = x.shape
    w = layer["w_iohw"].astype(COMPUTE_DTYPE)         # (Cin, Cout, 2, 2)
    cout = w.shape[1]
    y = jnp.einsum("nhwc,copq->nhpwqo", x.astype(COMPUTE_DTYPE), w,
                   preferred_element_type=jnp.float32)
    y = y.reshape(N, 2 * H, 2 * W, cout)
    y = jnp.maximum(y + layer["bias"].astype(jnp.float32), 0.0)
    return y.astype(COMPUTE_DTYPE)


def reference_forward(x_nchw, params):
    x = jnp.transpose(x_nchw, (0, 2, 3, 1)).astype(COMPUTE_DTYPE)
    for l1, l2 in params["encoder"]:
        x = _ref_conv(x, l1, 2, 1)
        x = _ref_conv(x, l2, 1, 1)
    for ld, lc in reversed(params["decoder"]):
        x = _ref_deconv(x, ld)
        x = _ref_conv(x, lc, 1, 1)
    return jnp.transpose(x, (0, 3, 1, 2)).astype(jnp.float32)


# ---------------------------------------------------------------------------
if __name__ == "__main__":
    model_cfg = {"input_dim": 4, "layer_num": 2}
    key = jax.random.PRNGKey(0)
    kx, kp = jax.random.split(key)

    x = jax.random.normal(kx, (2, 4, 16, 16), jnp.float32)     # NCHW like PyTorch
    raw = init_raw_params(kp, model_cfg["input_dim"], model_cfg["layer_num"])
    params = prepare_params(raw)                               # BN folded + padded offline

    out = jax.block_until_ready(encoder_decoder_forward(x, params))
    ref = jax.block_until_ready(reference_forward(x, params))

    assert out.shape == x.shape, (out.shape, x.shape)
    err = float(jnp.max(jnp.abs(out - ref)))
    assert err < 5e-2, err                                     # bf16-carry tolerance
    print("KERNEL_OK")
</pallas_src>

<mosaic_0001>
module attributes {stable_mosaic.version = 11 : i64} {
  func.func @_matmul_bias_relu_kernel(%arg0: i32, %arg1: memref<64x36xbf16, #tpu.memory_space<vmem>>, %arg2: memref<36x128xbf16, #tpu.memory_space<vmem>>, %arg3: memref<1x128xf32, #tpu.memory_space<vmem>>, %arg4: memref<64x128xbf16, #tpu.memory_space<vmem>>) attributes {dimension_semantics = [#tpu.dimension_semantics<parallel>], iteration_bounds = array<i64: 2>, scalar_prefetch = 0 : i64, scratch_operands = 0 : i64, tpu.core_type = #tpu.core_type<tc>, window_params = [{transform_indices = @transform_0, window_bounds = array<i64: 64, 36>}, {pipeline_mode = #tpu.pipeline_mode<synchronous>, transform_indices = @transform_1, window_bounds = array<i64: 36, 128>}, {pipeline_mode = #tpu.pipeline_mode<synchronous>, transform_indices = @transform_2, window_bounds = array<i64: 1, 128>}, {transform_indices = @transform_3, window_bounds = array<i64: 64, 128>}]} {
    %c0 = arith.constant 0 : index
    %c0_0 = arith.constant 0 : index
    %0 = vector.load %arg1[%c0, %c0_0] : memref<64x36xbf16, #tpu.memory_space<vmem>>, vector<64x36xbf16>
    %c0_1 = arith.constant 0 : index
    %c0_2 = arith.constant 0 : index
    %1 = vector.load %arg2[%c0_1, %c0_2] : memref<36x128xbf16, #tpu.memory_space<vmem>>, vector<36x128xbf16>
    %cst = arith.constant dense<0.000000e+00> : vector<64x128xf32>
    %2 = tpu.matmul %0, %1, %cst {dimension_numbers = #tpu.dot_dimension_numbers<[1], [0], [0], [1], [0, 0, 1, 1], [], []>} : vector<64x36xbf16>, vector<36x128xbf16>, vector<64x128xf32> -> vector<64x128xf32>
    %c0_3 = arith.constant 0 : index
    %c0_4 = arith.constant 0 : index
    %3 = vector.load %arg3[%c0_3, %c0_4] : memref<1x128xf32, #tpu.memory_space<vmem>>, vector<1x128xf32>
    %4 = vector.broadcast %3 : vector<1x128xf32> to vector<64x128xf32>
    %5 = arith.addf %2, %4 : vector<64x128xf32>
    %cst_5 = arith.constant 0.000000e+00 : f32
    %6 = vector.broadcast %cst_5 : f32 to vector<64x128xf32>
    %7 = arith.maximumf %5, %6 : vector<64x128xf32>
    %8 = arith.truncf %7 : vector<64x128xf32> to vector<64x128xbf16>
    %c0_6 = arith.constant 0 : index
    %c0_7 = arith.constant 0 : index
    %9 = vector.load %arg4[%c0_6, %c0_7] : memref<64x128xbf16, #tpu.memory_space<vmem>>, vector<64x128xbf16>
    tpu.vector_store %arg4[%c0_6, %c0_7], %8 {strides = array<i32>} : memref<64x128xbf16, #tpu.memory_space<vmem>>, vector<64x128xbf16>,
    return
  }
  func.func @transform_0(%arg0: i32) -> (i32, i32) {
    %c0_i32 = arith.constant 0 : i32
    %c0_i32_0 = arith.constant 0 : i32
    return %arg0, %c0_i32 : i32, i32
  }
  func.func @transform_1(%arg0: i32) -> (i32, i32) {
    %c0_i32 = arith.constant 0 : i32
    %c0_i32_0 = arith.constant 0 : i32
    %c0_i32_1 = arith.constant 0 : i32
    return %c0_i32, %c0_i32_0 : i32, i32
  }
  func.func @transform_2(%arg0: i32) -> (i32, i32) {
    %c0_i32 = arith.constant 0 : i32
    %c0_i32_0 = arith.constant 0 : i32
    %c0_i32_1 = arith.constant 0 : i32
    return %c0_i32, %c0_i32_0 : i32, i32
  }
  func.func @transform_3(%arg0: i32) -> (i32, i32) {
    %c0_i32 = arith.constant 0 : i32
    %c0_i32_0 = arith.constant 0 : i32
    return %arg0, %c0_i32 : i32, i32
  }
}

module attributes {stable_mosaic.version = 11 : i64} {
  func.func @_matmul_bias_relu_kernel(%arg0: i32, %arg1: memref<16x72xbf16, #tpu.memory_space<vmem>>, %arg2: memref<72x128xbf16, #tpu.memory_space<vmem>>, %arg3: memref<1x128xf32, #tpu.memory_space<vmem>>, %arg4: memref<16x128xbf16, #tpu.memory_space<vmem>>) attributes {dimension_semantics = [#tpu.dimension_semantics<parallel>], iteration_bounds = array<i64: 2>, scalar_prefetch = 0 : i64, scratch_operands = 0 : i64, tpu.core_type = #tpu.core_type<tc>, window_params = [{transform_indices = @transform_0, window_bounds = array<i64: 16, 72>}, {pipeline_mode = #tpu.pipeline_mode<synchronous>, transform_indices = @transform_1, window_bounds = array<i64: 72, 128>}, {pipeline_mode = #tpu.pipeline_mode<synchronous>, transform_indices = @transform_2, window_bounds = array<i64: 1, 128>}, {transform_indices = @transform_3, window_bounds = array<i64: 16, 128>}]} {
    %c0 = arith.constant 0 : index
    %c0_0 = arith.constant 0 : index
    %0 = vector.load %arg1[%c0, %c0_0] : memref<16x72xbf16, #tpu.memory_space<vmem>>, vector<16x72xbf16>
    %c0_1 = arith.constant 0 : index
    %c0_2 = arith.constant 0 : index
    %1 = vector.load %arg2[%c0_1, %c0_2] : memref<72x128xbf16, #tpu.memory_space<vmem>>, vector<72x128xbf16>
    %cst = arith.constant dense<0.000000e+00> : vector<16x128xf32>
    %2 = tpu.matmul %0, %1, %cst {dimension_numbers = #tpu.dot_dimension_numbers<[1], [0], [0], [1], [0, 0, 1, 1], [], []>} : vector<16x72xbf16>, vector<72x128xbf16>, vector<16x128xf32> -> vector<16x128xf32>
    %c0_3 = arith.constant 0 : index
    %c0_4 = arith.constant 0 : index
    %3 = vector.load %arg3[%c0_3, %c0_4] : memref<1x128xf32, #tpu.memory_space<vmem>>, vector<1x128xf32>
    %4 = vector.broadcast %3 : vector<1x128xf32> to vector<16x128xf32>
    %5 = arith.addf %2, %4 : vector<16x128xf32>
    %cst_5 = arith.constant 0.000000e+00 : f32
    %6 = vector.broadcast %cst_5 : f32 to vector<16x128xf32>
    %7 = arith.maximumf %5, %6 : vector<16x128xf32>
    %8 = arith.truncf %7 : vector<16x128xf32> to vector<16x128xbf16>
    %c0_6 = arith.constant 0 : index
    %c0_7 = arith.constant 0 : index
    %9 = vector.load %arg4[%c0_6, %c0_7] : memref<16x128xbf16, #tpu.memory_space<vmem>>, vector<16x128xbf16>
    tpu.vector_store %arg4[%c0_6, %c0_7], %8 {strides = array<i32>} : memref<16x128xbf16, #tpu.memory_space<vmem>>, vector<16x128xbf16>,
    return
  }
  func.func @transform_0(%arg0: i32) -> (i32, i32) {
    %c0_i32 = arith.constant 0 : i32
    %c0_i32_0 = arith.constant 0 : i32
    return %arg0, %c0_i32 : i32, i32
  }
  func.func @transform_1(%arg0: i32) -> (i32, i32) {
    %c0_i32 = arith.constant 0 : i32
    %c0_i32_0 = arith.constant 0 : i32
    %c0_i32_1 = arith.constant 0 : i32
    return %c0_i32, %c0_i32_0 : i32, i32
  }
  func.func @transform_2(%arg0: i32) -> (i32, i32) {
    %c0_i32 = arith.constant 0 : i32
    %c0_i32_0 = arith.constant 0 : i32
    %c0_i32_1 = arith.constant 0 : i32
    return %c0_i32, %c0_i32_0 : i32, i32
  }
  func.func @transform_3(%arg0: i32) -> (i32, i32) {
    %c0_i32 = arith.constant 0 : i32
    %c0_i32_0 = arith.constant 0 : i32
    return %arg0, %c0_i32 : i32, i32
  }
}

module attributes {stable_mosaic.version = 11 : i64} {
  func.func @_matmul_bias_relu_kernel(%arg0: i32, %arg1: memref<16x16xbf16, #tpu.memory_space<vmem>>, %arg2: memref<16x128xbf16, #tpu.memory_space<vmem>>, %arg3: memref<1x128xf32, #tpu.memory_space<vmem>>, %arg4: memref<16x128xbf16, #tpu.memory_space<vmem>>) attributes {dimension_semantics = [#tpu.dimension_semantics<parallel>], iteration_bounds = array<i64: 2>, scalar_prefetch = 0 : i64, scratch_operands = 0 : i64, tpu.core_type = #tpu.core_type<tc>, window_params = [{transform_indices = @transform_0, window_bounds = array<i64: 16, 16>}, {pipeline_mode = #tpu.pipeline_mode<synchronous>, transform_indices = @transform_1, window_bounds = array<i64: 16, 128>}, {pipeline_mode = #tpu.pipeline_mode<synchronous>, transform_indices = @transform_2, window_bounds = array<i64: 1, 128>}, {transform_indices = @transform_3, window_bounds = array<i64: 16, 128>}]} {
    %c0 = arith.constant 0 : index
    %c0_0 = arith.constant 0 : index
    %0 = vector.load %arg1[%c0, %c0_0] : memref<16x16xbf16, #tpu.memory_space<vmem>>, vector<16x16xbf16>
    %c0_1 = arith.constant 0 : index
    %c0_2 = arith.constant 0 : index
    %1 = vector.load %arg2[%c0_1, %c0_2] : memref<16x128xbf16, #tpu.memory_space<vmem>>, vector<16x128xbf16>
    %cst = arith.constant dense<0.000000e+00> : vector<16x128xf32>
    %2 = tpu.matmul %0, %1, %cst {dimension_numbers = #tpu.dot_dimension_numbers<[1], [0], [0], [1], [0, 0, 1, 1], [], []>} : vector<16x16xbf16>, vector<16x128xbf16>, vector<16x128xf32> -> vector<16x128xf32>
    %c0_3 = arith.constant 0 : index
    %c0_4 = arith.constant 0 : index
    %3 = vector.load %arg3[%c0_3, %c0_4] : memref<1x128xf32, #tpu.memory_space<vmem>>, vector<1x128xf32>
    %4 = vector.broadcast %3 : vector<1x128xf32> to vector<16x128xf32>
    %5 = arith.addf %2, %4 : vector<16x128xf32>
    %cst_5 = arith.constant 0.000000e+00 : f32
    %6 = vector.broadcast %cst_5 : f32 to vector<16x128xf32>
    %7 = arith.maximumf %5, %6 : vector<16x128xf32>
    %8 = arith.truncf %7 : vector<16x128xf32> to vector<16x128xbf16>
    %c0_6 = arith.constant 0 : index
    %c0_7 = arith.constant 0 : index
    %9 = vector.load %arg4[%c0_6, %c0_7] : memref<16x128xbf16, #tpu.memory_space<vmem>>, vector<16x128xbf16>
    tpu.vector_store %arg4[%c0_6, %c0_7], %8 {strides = array<i32>} : memref<16x128xbf16, #tpu.memory_space<vmem>>, vector<16x128xbf16>,
    return
  }
  func.func @transform_0(%arg0: i32) -> (i32, i32) {
    %c0_i32 = arith.constant 0 : i32
    %c0_i32_0 = arith.constant 0 : i32
    return %arg0, %c0_i32 : i32, i32
  }
  func.func @transform_1(%arg0: i32) -> (i32, i32) {
    %c0_i32 = arith.constant 0 : i32
    %c0_i32_0 = arith.constant 0 : i32
    %c0_i32_1 = arith.constant 0 : i32
    return %c0_i32, %c0_i32_0 : i32, i32
  }
  func.func @transform_2(%arg0: i32) -> (i32, i32) {
    %c0_i32 = arith.constant 0 : i32
    %c0_i32_0 = arith.constant 0 : i32
    %c0_i32_1 = arith.constant 0 : i32
    return %c0_i32, %c0_i32_0 : i32, i32
  }
  func.func @transform_3(%arg0: i32) -> (i32, i32) {
    %c0_i32 = arith.constant 0 : i32
    %c0_i32_0 = arith.constant 0 : i32
    return %arg0, %c0_i32 : i32, i32
  }
}

module attributes {stable_mosaic.version = 11 : i64} {
  func.func @_matmul_bias_relu_kernel(%arg0: i32, %arg1: memref<64x72xbf16, #tpu.memory_space<vmem>>, %arg2: memref<72x128xbf16, #tpu.memory_space<vmem>>, %arg3: memref<1x128xf32, #tpu.memory_space<vmem>>, %arg4: memref<64x128xbf16, #tpu.memory_space<vmem>>) attributes {dimension_semantics = [#tpu.dimension_semantics<parallel>], iteration_bounds = array<i64: 2>, scalar_prefetch = 0 : i64, scratch_operands = 0 : i64, tpu.core_type = #tpu.core_type<tc>, window_params = [{transform_indices = @transform_0, window_bounds = array<i64: 64, 72>}, {pipeline_mode = #tpu.pipeline_mode<synchronous>, transform_indices = @transform_1, window_bounds = array<i64: 72, 128>}, {pipeline_mode = #tpu.pipeline_mode<synchronous>, transform_indices = @transform_2, window_bounds = array<i64: 1, 128>}, {transform_indices = @transform_3, window_bounds = array<i64: 64, 128>}]} {
    %c0 = arith.constant 0 : index
    %c0_0 = arith.constant 0 : index
    %0 = vector.load %arg1[%c0, %c0_0] : memref<64x72xbf16, #tpu.memory_space<vmem>>, vector<64x72xbf16>
    %c0_1 = arith.constant 0 : index
    %c0_2 = arith.constant 0 : index
    %1 = vector.load %arg2[%c0_1, %c0_2] : memref<72x128xbf16, #tpu.memory_space<vmem>>, vector<72x128xbf16>
    %cst = arith.constant dense<0.000000e+00> : vector<64x128xf32>
    %2 = tpu.matmul %0, %1, %cst {dimension_numbers = #tpu.dot_dimension_numbers<[1], [0], [0], [1], [0, 0, 1, 1], [], []>} : vector<64x72xbf16>, vector<72x128xbf16>, vector<64x128xf32> -> vector<64x128xf32>
    %c0_3 = arith.constant 0 : index
    %c0_4 = arith.constant 0 : index
    %3 = vector.load %arg3[%c0_3, %c0_4] : memref<1x128xf32, #tpu.memory_space<vmem>>, vector<1x128xf32>
    %4 = vector.broadcast %3 : vector<1x128xf32> to vector<64x128xf32>
    %5 = arith.addf %2, %4 : vector<64x128xf32>
    %cst_5 = arith.constant 0.000000e+00 : f32
    %6 = vector.broadcast %cst_5 : f32 to vector<64x128xf32>
    %7 = arith.maximumf %5, %6 : vector<64x128xf32>
    %8 = arith.truncf %7 : vector<64x128xf32> to vector<64x128xbf16>
    %c0_6 = arith.constant 0 : index
    %c0_7 = arith.constant 0 : index
    %9 = vector.load %arg4[%c0_6, %c0_7] : memref<64x128xbf16, #tpu.memory_space<vmem>>, vector<64x128xbf16>
    tpu.vector_store %arg4[%c0_6, %c0_7], %8 {strides = array<i32>} : memref<64x128xbf16, #tpu.memory_space<vmem>>, vector<64x128xbf16>,
    return
  }
  func.func @transform_0(%arg0: i32) -> (i32, i32) {
    %c0_i32 = arith.constant 0 : i32
    %c0_i32_0 = arith.constant 0 : i32
    return %arg0, %c0_i32 : i32, i32
  }
  func.func @transform_1(%arg0: i32) -> (i32, i32) {
    %c0_i32 = arith.constant 0 : i32
    %c0_i32_0 = arith.constant 0 : i32
    %c0_i32_1 = arith.constant 0 : i32
    return %c0_i32, %c0_i32_0 : i32, i32
  }
  func.func @transform_2(%arg0: i32) -> (i32, i32) {
    %c0_i32 = arith.constant 0 : i32
    %c0_i32_0 = arith.constant 0 : i32
    %c0_i32_1 = arith.constant 0 : i32
    return %c0_i32, %c0_i32_0 : i32, i32
  }
  func.func @transform_3(%arg0: i32) -> (i32, i32) {
    %c0_i32 = arith.constant 0 : i32
    %c0_i32_0 = arith.constant 0 : i32
    return %arg0, %c0_i32 : i32, i32
  }
}

module attributes {stable_mosaic.version = 11 : i64} {
  func.func @_matmul_bias_relu_kernel(%arg0: i32, %arg1: memref<64x8xbf16, #tpu.memory_space<vmem>>, %arg2: memref<8x128xbf16, #tpu.memory_space<vmem>>, %arg3: memref<1x128xf32, #tpu.memory_space<vmem>>, %arg4: memref<64x128xbf16, #tpu.memory_space<vmem>>) attributes {dimension_semantics = [#tpu.dimension_semantics<parallel>], iteration_bounds = array<i64: 2>, scalar_prefetch = 0 : i64, scratch_operands = 0 : i64, tpu.core_type = #tpu.core_type<tc>, window_params = [{transform_indices = @transform_0, window_bounds = array<i64: 64, 8>}, {pipeline_mode = #tpu.pipeline_mode<synchronous>, transform_indices = @transform_1, window_bounds = array<i64: 8, 128>}, {pipeline_mode = #tpu.pipeline_mode<synchronous>, transform_indices = @transform_2, window_bounds = array<i64: 1, 128>}, {transform_indices = @transform_3, window_bounds = array<i64: 64, 128>}]} {
    %c0 = arith.constant 0 : index
    %c0_0 = arith.constant 0 : index
    %0 = vector.load %arg1[%c0, %c0_0] : memref<64x8xbf16, #tpu.memory_space<vmem>>, vector<64x8xbf16>
    %c0_1 = arith.constant 0 : index
    %c0_2 = arith.constant 0 : index
    %1 = vector.load %arg2[%c0_1, %c0_2] : memref<8x128xbf16, #tpu.memory_space<vmem>>, vector<8x128xbf16>
    %cst = arith.constant dense<0.000000e+00> : vector<64x128xf32>
    %2 = tpu.matmul %0, %1, %cst {dimension_numbers = #tpu.dot_dimension_numbers<[1], [0], [0], [1], [0, 0, 1, 1], [], []>} : vector<64x8xbf16>, vector<8x128xbf16>, vector<64x128xf32> -> vector<64x128xf32>
    %c0_3 = arith.constant 0 : index
    %c0_4 = arith.constant 0 : index
    %3 = vector.load %arg3[%c0_3, %c0_4] : memref<1x128xf32, #tpu.memory_space<vmem>>, vector<1x128xf32>
    %4 = vector.broadcast %3 : vector<1x128xf32> to vector<64x128xf32>
    %5 = arith.addf %2, %4 : vector<64x128xf32>
    %cst_5 = arith.constant 0.000000e+00 : f32
    %6 = vector.broadcast %cst_5 : f32 to vector<64x128xf32>
    %7 = arith.maximumf %5, %6 : vector<64x128xf32>
    %8 = arith.truncf %7 : vector<64x128xf32> to vector<64x128xbf16>
    %c0_6 = arith.constant 0 : index
    %c0_7 = arith.constant 0 : index
    %9 = vector.load %arg4[%c0_6, %c0_7] : memref<64x128xbf16, #tpu.memory_space<vmem>>, vector<64x128xbf16>
    tpu.vector_store %arg4[%c0_6, %c0_7], %8 {strides = array<i32>} : memref<64x128xbf16, #tpu.memory_space<vmem>>, vector<64x128xbf16>,
    return
  }
  func.func @transform_0(%arg0: i32) -> (i32, i32) {
    %c0_i32 = arith.constant 0 : i32
    %c0_i32_0 = arith.constant 0 : i32
    return %arg0, %c0_i32 : i32, i32
  }
  func.func @transform_1(%arg0: i32) -> (i32, i32) {
    %c0_i32 = arith.constant 0 : i32
    %c0_i32_0 = arith.constant 0 : i32
    %c0_i32_1 = arith.constant 0 : i32
    return %c0_i32, %c0_i32_0 : i32, i32
  }
  func.func @transform_2(%arg0: i32) -> (i32, i32) {
    %c0_i32 = arith.constant 0 : i32
    %c0_i32_0 = arith.constant 0 : i32
    %c0_i32_1 = arith.constant 0 : i32
    return %c0_i32, %c0_i32_0 : i32, i32
  }
  func.func @transform_3(%arg0: i32) -> (i32, i32) {
    %c0_i32 = arith.constant 0 : i32
    %c0_i32_0 = arith.constant 0 : i32
    return %arg0, %c0_i32 : i32, i32
  }
}

module attributes {stable_mosaic.version = 11 : i64} {
  func.func @_matmul_bias_relu_kernel(%arg0: i32, %arg1: memref<256x36xbf16, #tpu.memory_space<vmem>>, %arg2: memref<36x128xbf16, #tpu.memory_space<vmem>>, %arg3: memref<1x128xf32, #tpu.memory_space<vmem>>, %arg4: memref<256x128xbf16, #tpu.memory_space<vmem>>) attributes {dimension_semantics = [#tpu.dimension_semantics<parallel>], iteration_bounds = array<i64: 2>, scalar_prefetch = 0 : i64, scratch_operands = 0 : i64, tpu.core_type = #tpu.core_type<tc>, window_params = [{transform_indices = @transform_0, window_bounds = array<i64: 256, 36>}, {pipeline_mode = #tpu.pipeline_mode<synchronous>, transform_indices = @transform_1, window_bounds = array<i64: 36, 128>}, {pipeline_mode = #tpu.pipeline_mode<synchronous>, transform_indices = @transform_2, window_bounds = array<i64: 1, 128>}, {transform_indices = @transform_3, window_bounds = array<i64: 256, 128>}]} {
    %c0 = arith.constant 0 : index
    %c0_0 = arith.constant 0 : index
    %0 = vector.load %arg1[%c0, %c0_0] : memref<256x36xbf16, #tpu.memory_space<vmem>>, vector<256x36xbf16>
    %c0_1 = arith.constant 0 : index
    %c0_2 = arith.constant 0 : index
    %1 = vector.load %arg2[%c0_1, %c0_2] : memref<36x128xbf16, #tpu.memory_space<vmem>>, vector<36x128xbf16>
    %cst = arith.constant dense<0.000000e+00> : vector<256x128xf32>
    %2 = tpu.matmul %0, %1, %cst {dimension_numbers = #tpu.dot_dimension_numbers<[1], [0], [0], [1], [0, 0, 1, 1], [], []>} : vector<256x36xbf16>, vector<36x128xbf16>, vector<256x128xf32> -> vector<256x128xf32>
    %c0_3 = arith.constant 0 : index
    %c0_4 = arith.constant 0 : index
    %3 = vector.load %arg3[%c0_3, %c0_4] : memref<1x128xf32, #tpu.memory_space<vmem>>, vector<1x128xf32>
    %4 = vector.broadcast %3 : vector<1x128xf32> to vector<256x128xf32>
    %5 = arith.addf %2, %4 : vector<256x128xf32>
    %cst_5 = arith.constant 0.000000e+00 : f32
    %6 = vector.broadcast %cst_5 : f32 to vector<256x128xf32>
    %7 = arith.maximumf %5, %6 : vector<256x128xf32>
    %8 = arith.truncf %7 : vector<256x128xf32> to vector<256x128xbf16>
    %c0_6 = arith.constant 0 : index
    %c0_7 = arith.constant 0 : index
    %9 = vector.load %arg4[%c0_6, %c0_7] : memref<256x128xbf16, #tpu.memory_space<vmem>>, vector<256x128xbf16>
    tpu.vector_store %arg4[%c0_6, %c0_7], %8 {strides = array<i32>} : memref<256x128xbf16, #tpu.memory_space<vmem>>, vector<256x128xbf16>,
    return
  }
  func.func @transform_0(%arg0: i32) -> (i32, i32) {
    %c0_i32 = arith.constant 0 : i32
    %c0_i32_0 = arith.constant 0 : i32
    return %arg0, %c0_i32 : i32, i32
  }
  func.func @transform_1(%arg0: i32) -> (i32, i32) {
    %c0_i32 = arith.constant 0 : i32
    %c0_i32_0 = arith.constant 0 : i32
    %c0_i32_1 = arith.constant 0 : i32
    return %c0_i32, %c0_i32_0 : i32, i32
  }
  func.func @transform_2(%arg0: i32) -> (i32, i32) {
    %c0_i32 = arith.constant 0 : i32
    %c0_i32_0 = arith.constant 0 : i32
    %c0_i32_1 = arith.constant 0 : i32
    return %c0_i32, %c0_i32_0 : i32, i32
  }
  func.func @transform_3(%arg0: i32) -> (i32, i32) {
    %c0_i32 = arith.constant 0 : i32
    %c0_i32_0 = arith.constant 0 : i32
    return %arg0, %c0_i32 : i32, i32
  }
}

</mosaic_0001>

<llo_original>
// kernel: encoder_decoder_forward.8
$region0: #{encoder_decoder_forward.8}
  #allocation0 [shape = 'u32[]', space=smem, size = 0x4, offset = 0x4, fixed_abs, tag = 'smem constant byte address 0x4 - core index']
  #allocation1 [shape = 'u32[72,128]{1,0:T(1,128)}', space=vmem, size = 0x9000, scoped, tag = 'internal scratch']
  %s0 = inlined_call_operand.vmem [shape: bf16[128,36], index: 0, kind: input, shape index: {}]
  %s1 = inlined_call_operand.vmem [shape: bf16[36,128], index: 1, kind: input, shape index: {}]
  %s2 = inlined_call_operand.vmem [shape: f32[1,128], index: 2, kind: input, shape index: {}]
  %s3 = inlined_call_operand.vmem [shape: bf16[128,128], index: 3, kind: output, shape index: {}]
  %s4 = sld [smem:[#allocation0]]
  $region45: #{encoder_decoder_forward.8} parent=0
    _
  %s6 = ssub.s32 1, %s4
  %s7 = scalar_select 0, %s6, %s4
  loop: start=0, step=1, limit=4
  $region2: #{encoder_decoder_forward.8} parent=0 // loop_pre_header
    _
  $region3: #{encoder_decoder_forward.8} parent=0 // loop_header
    %s9 = sphi 0, %s13
    %p10 = scmp.ge.s32.totalorder %s9, 4
    %s19 = sphi 0, %s21
    %s22 = sphi 0, %s19
    %s23 = sphi 0, %s22
    %s39 = sphi 0, %s23
    %s43 = sphi 0, %s43
    %s45 = sphi 0, %s43
    %s46 = sphi 0, %s45
    %s60 = sphi 0, %s46
    %s64 = sphi 0, %s64
    %s66 = sphi 0, %s64
    %s67 = sphi 0, %s66
    %s81 = sphi 0, %s67
    %s87 = sphi 0, %s89
    %s90 = sphi 0, %s87
    %s91 = sphi 0, %s90
    %s107 = sphi 0, %s91
  $region4: #{encoder_decoder_forward.8} parent=0 // loop_header_branch
    %12 = sbr.rel (%p10) target = $region8
  $region5: #{encoder_decoder_forward.8} parent=0 // loop_body
    %s14 = ssub.s32 %s9, 1
    %s15 = ssub.s32 %s9, 2
    %s16 = sadd.s32 %s9, 1
    %s17 = ssub.s32 %s9, %s16
    %p18 = scmp.eq.s32.totalorder %s17, 0
    %s20 = sadd.s32 %s19, 1
    %s21 = scalar_select %p18, %s19, %s20
    %p24 = pneg %p18
    %p25 = scmp.eq.s32.totalorder %s9, 1
    %p26 = por %p24, %p25
    %p27 = scmp.ne.s32.totalorder %s19, %s22
    %p28 = scmp.eq.s32.totalorder %s9, 0
    %p29 = por %p27, %p28
    %p30 = scmp.ne.s32.totalorder %s19, %s22
    %p31 = scmp.eq.s32.totalorder %s14, 1
    %p32 = por %p30, %p31
    %p33 = scmp.ne.s32.totalorder %s22, %s23
    %p34 = scmp.eq.s32.totalorder %s14, 0
    %p35 = por %p33, %p34
    %p36 = scmp.ne.s32.totalorder %s22, %s23
    %p37 = scmp.eq.s32.totalorder %s15, 1
    %p38 = por %p36, %p37
    %p40 = scmp.ne.s32.totalorder %s23, %s39
    %p41 = scmp.eq.s32.totalorder %s15, 0
    %p42 = por %p40, %p41
    %s44 = sadd.s32 %s43, 1
    %p47 = scmp.eq.s32.totalorder %s9, 1
    %p48 = scmp.ne.s32.totalorder %s43, %s45
    %p49 = scmp.eq.s32.totalorder %s9, 0
    %p50 = por %p48, %p49
    %p51 = scmp.ne.s32.totalorder %s43, %s45
    %p52 = scmp.eq.s32.totalorder %s14, 1
    %p53 = por %p51, %p52
    %p54 = scmp.ne.s32.totalorder %s45, %s46
    %p55 = scmp.eq.s32.totalorder %s14, 0
    %p56 = por %p54, %p55
    %p57 = scmp.ne.s32.totalorder %s45, %s46
    %p58 = scmp.eq.s32.totalorder %s15, 1
    %p59 = por %p57, %p58
    %p61 = scmp.ne.s32.totalorder %s46, %s60
    %p62 = scmp.eq.s32.totalorder %s15, 0
    %p63 = por %p61, %p62
    %s65 = sadd.s32 %s64, 1
    %p68 = scmp.eq.s32.totalorder %s9, 1
    %p69 = scmp.ne.s32.totalorder %s64, %s66
    %p70 = scmp.eq.s32.totalorder %s9, 0
    %p71 = por %p69, %p70
    %p72 = scmp.ne.s32.totalorder %s64, %s66
    %p73 = scmp.eq.s32.totalorder %s14, 1
    %p74 = por %p72, %p73
    %p75 = scmp.ne.s32.totalorder %s66, %s67
    %p76 = scmp.eq.s32.totalorder %s14, 0
    %p77 = por %p75, %p76
    %p78 = scmp.ne.s32.totalorder %s66, %s67
    %p79 = scmp.eq.s32.totalorder %s15, 1
    %p80 = por %p78, %p79
    %p82 = scmp.ne.s32.totalorder %s67, %s81
    %p83 = scmp.eq.s32.totalorder %s15, 0
    %p84 = por %p82, %p83
    %s85 = ssub.s32 %s9, %s16
    %p86 = scmp.eq.s32.totalorder %s85, 0
    %s88 = sadd.s32 %s87, 1
    %s89 = scalar_select %p86, %s87, %s88
    %p92 = pneg %p86
    %p93 = scmp.eq.s32.totalorder %s9, 1
    %p94 = por %p92, %p93
    %p95 = scmp.ne.s32.totalorder %s87, %s90
    %p96 = scmp.eq.s32.totalorder %s9, 0
    %p97 = por %p95, %p96
    %p98 = scmp.ne.s32.totalorder %s87, %s90
    %p99 = scmp.eq.s32.totalorder %s14, 1
    %p100 = por %p98, %p99
    %p101 = scmp.ne.s32.totalorder %s90, %s91
    %p102 = scmp.eq.s32.totalorder %s14, 0
    %p103 = por %p101, %p102
    %p104 = scmp.ne.s32.totalorder %s90, %s91
    %p105 = scmp.eq.s32.totalorder %s15, 1
    %p106 = por %p104, %p105
    %p108 = scmp.ne.s32.totalorder %s91, %s107
    %p109 = scmp.eq.s32.totalorder %s15, 0
    %p110 = por %p108, %p109
    %p111 = scmp.le.s32.totalorder 1, %s9
    %p112 = scmp.lt.s32.totalorder %s9, 3
    %p113 = pnand %p111, %p112
    %p114 = pneg %p113
    // Predicated region
    $region9: #{encoder_decoder_forward.8} parent=5 // pred_check
      _
    $region10: #{encoder_decoder_forward.8} parent=5 // pred_check_branch
      %116 = sbr.rel (%p113) target = $region12
    $region11: #{encoder_decoder_forward.8} parent=5 // pred_region
      %s117 = ssub.s32 %s9, 1
      // Predicated region
      $region13: #{encoder_decoder_forward.8} parent=11 // pred_check
        %p118 = pneg %p56
      $region14: #{encoder_decoder_forward.8} parent=11 // pred_check_branch
        %120 = sbr.rel (%p118) target = $region16
      $region15: #{encoder_decoder_forward.8} parent=11 // pred_region
        _
      $region16: #{encoder_decoder_forward.8} parent=11 // pred_fallthru
        _
      // Predicated region
      $region17: #{encoder_decoder_forward.8} parent=11 // pred_check
        %p121 = pneg %p77
      $region18: #{encoder_decoder_forward.8} parent=11 // pred_check_branch
        %123 = sbr.rel (%p121) target = $region20
      $region19: #{encoder_decoder_forward.8} parent=11 // pred_region
        _
      $region20: #{encoder_decoder_forward.8} parent=11 // pred_fallthru
        _
    $region12: #{encoder_decoder_forward.8} parent=5 // pred_fallthru
      _
    %p124 = scmp.lt.s32.totalorder %s9, 2
    // Predicated region
    $region21: #{encoder_decoder_forward.8} parent=5 // pred_check
      %p125 = pneg %p124
    $region22: #{encoder_decoder_forward.8} parent=5 // pred_check_branch
      %127 = sbr.rel (%p125) target = $region24
    $region23: #{encoder_decoder_forward.8} parent=5 // pred_region
      // Predicated region
      $region25: #{encoder_decoder_forward.8} parent=23 // pred_check
        %p128 = pneg %p29
      $region26: #{encoder_decoder_forward.8} parent=23 // pred_check_branch
        %130 = sbr.rel (%p128) target = $region28
      $region27: #{encoder_decoder_forward.8} parent=23 // pred_region
        %s131 = smul.u32 8, %s9
        %p132 = scmp.lt.s32.totalorder %s131, 15
        %s133 = scalar_select %p132, %s131, 15
        %s134 = smul.addr %s133, 4
        %s135 = scalar_lea.vmem %s0, %s134
        %s136 = smul.u32 8, %s9
      $region28: #{encoder_decoder_forward.8} parent=23 // pred_fallthru
        _
    $region24: #{encoder_decoder_forward.8} parent=5 // pred_fallthru
      _
    %p137 = scmp.le.s32.totalorder 1, %s9
    %p138 = scmp.lt.s32.totalorder %s9, 3
    %p139 = pnand %p137, %p138
    %p140 = pneg %p139
    // Predicated region
    $region29: #{encoder_decoder_forward.8} parent=5 // pred_check
      _
    $region30: #{encoder_decoder_forward.8} parent=5 // pred_check_branch
      %142 = sbr.rel (%p139) target = $region32
    $region31: #{encoder_decoder_forward.8} parent=5 // pred_region
      %s143 = ssub.s32 %s9, 1
      %s144 = smul.u32 8, %s14
      %p145 = scmp.lt.s32.totalorder %s144, 15
      %s146 = scalar_select %p145, %s144, 15
      %s147 = smul.addr %s146, 4
      %s148 = scalar_lea.vmem %s0, %s147
      %p149 = pneg %p35
      %p150 = pneg %p32
      %p151 = pneg %p56
      %p152 = pneg %p53
      %p153 = pneg %p77
      %p154 = pneg %p74
      %p155 = pneg %p103
      %p156 = pneg %p100
      %s157 = smul.u32 8, %s14
      %p158 = scmp.lt.s32.totalorder %s157, 15
      %s159 = scalar_select %p158, %s157, 15
      %s160 = smul.addr %s159, 4
      %s161 = scalar_lea.vmem %s3, %s160
      %s162 = smul.u32 8, %s14
      %p163 = scmp.lt.s32.totalorder %s162, 15
      %s164 = scalar_select %p163, %s162, 15
      %s165 = smul.addr %s164, 4
      %s166 = scalar_lea.vmem %s0, %s165
      %s167 = smul.u32 8, %s14
      %s168 = smul.u32 8, %s14
      %p169 = scmp.lt.s32.totalorder %s168, 15
      %s170 = scalar_select %p169, %s168, 15
      %s171 = smul.addr %s170, 4
      %s172 = scalar_lea.vmem %s3, %s171
      %s173 = smul.u32 8, %s14
      %v175 = vld [vmem:[%s166] sm:$0xf]
      %v176 = vld [vmem:[%s166 + $0x4] sm:$0xf]
      %v177 = vld [vmem:[%s166 + $0x8] sm:$0xf]
      %v178 = vld [vmem:[%s166 + $0xc] sm:$0xf]
      %v179 = vld [vmem:[%s166 + $0x10] sm:$0xf]
      %v180 = vld [vmem:[%s166 + $0x14] sm:$0xf]
      %v181 = vld [vmem:[%s166 + $0x18] sm:$0xf]
      %v182 = vld [vmem:[%s166 + $0x1c] sm:$0xf]
      %v183 = vld [vmem:[%s1] sm:$0xf]
      %v184 = vld [vmem:[%s1 + $0x4] sm:$0xf]
      %v185 = vld [vmem:[%s1 + $0x8] sm:$0xf]
      %v186 = vld [vmem:[%s1 + $0xc] sm:$0xf]
      %v187 = vld [vmem:[%s1 + $0x10] sm:$0x3]
      %v188 = vld [vmem:[%s2] sm:$0x1]
      %v190 = vperm.slane %v188, 0
      %v200 = vunpack.c.l.b16 %v175
      %v201 = vunpack.c.l.b16 %v176
      %v202 = vunpack.c.l.b16 %v177
      %v203 = vunpack.c.l.b16 %v178
      %v204 = vunpack.c.l.b16 %v179
      %v205 = vunpack.c.l.b16 %v180
      %v206 = vunpack.c.l.b16 %v181
      %v207 = vunpack.c.l.b16 %v182
      %v208 = vpack.c.b16 %v201, %v200
      %v209 = vpack.c.b16 %v203, %v202
      %v210 = vpack.c.b16 %v205, %v204
      %v211 = vpack.c.b16 %v207, %v206
      %v217 = vunpack.c.l.b16 %v183
      %v218 = vunpack.c.l.b16 %v184
      %v219 = vunpack.c.l.b16 %v185
      %v220 = vunpack.c.l.b16 %v186
      %v221 = vunpack.c.l.b16 %v187
      %v222 = vpack.c.b16 %v218, %v217
      %v223 = vpack.c.b16 %v220, %v219
      %v224 = vpack.c.b16 %v221, %v221
      %vm227 = vcmask 293888
      %v229 = vsel %vm227, %v208, 0
      %v232 = vsel %vm227, %v209, 0
      %v235 = vsel %vm227, %v210, 0
      %v238 = vsel %vm227, %v211, 0
      %vm240 = vcmask 1041408
      %v242 = vsel %vm240, %v224, 0
      %244 = vmatpush.bf16.msra.mxu0 0
      %245 = vmatpush.bf16.msra.mxu0 0
      %246 = vmatpush.bf16.msra.mxu0 0
      %247 = vmatpush.bf16.msra.mxu0 0
      %248 = vmatpush.bf16.msra.mxu0 0
      %249 = vmatpush.bf16.msra.mxu0 %v242
      %250 = vmatpush.bf16.msra.mxu0 %v223
      %251 = vmatpush.bf16.msra.mxu0 %v222
      %252 = vmatmul.bf16.gmra.mxu0 %v229
      %v253 = vpop.f32.mrf.mxu0
      %v254 = vadd.f32 %v190, %v253
      %v255 = vpop.f32.mrf.mxu0
      %v256 = vadd.f32 %v190, %v255
      %257 = vmatmul.bf16.gmra.mxu0 %v232
      %v258 = vpop.f32.mrf.mxu0
      %v259 = vadd.f32 %v190, %v258
      %v260 = vpop.f32.mrf.mxu0
      %v261 = vadd.f32 %v190, %v260
      %262 = vmatmul.bf16.gmra.mxu0 %v235
      %v263 = vpop.f32.mrf.mxu0
      %v264 = vadd.f32 %v190, %v263
      %v265 = vpop.f32.mrf.mxu0
      %v266 = vadd.f32 %v190, %v265
      %267 = vmatmul.bf16.gmra.mxu0 %v238
      %v268 = vpop.f32.mrf.mxu0
      %v269 = vadd.f32 %v190, %v268
      %v270 = vpop.f32.mrf.mxu0
      %v271 = vadd.f32 %v190, %v270
      %272 = vdwg.mxu0
      %v273 = vmax.f32 %v254, 0.0
      %v274 = vmax.f32 %v256, 0.0
      %v275 = vmax.f32 %v259, 0.0
      %v276 = vmax.f32 %v261, 0.0
      %v277 = vmax.f32 %v264, 0.0
      %v278 = vmax.f32 %v266, 0.0
      %v279 = vmax.f32 %v269, 0.0
      %v280 = vmax.f32 %v271, 0.0
      %v281 = vpack.c.bf16 %v273, %v273
      %v282 = vpack.c.bf16 %v274, %v274
      %v283 = vpack.c.bf16 %v275, %v275
      %v284 = vpack.c.bf16 %v276, %v276
      %v285 = vpack.c.bf16 %v277, %v277
      %v286 = vpack.c.bf16 %v278, %v278
      %v287 = vpack.c.bf16 %v279, %v279
      %v288 = vpack.c.bf16 %v280, %v280
      %289 = vst [vmem:[%s172] sm:$0xf] %v281
      %290 = vst [vmem:[%s172 + $0x4] sm:$0xf] %v282
      %291 = vst [vmem:[%s172 + $0x8] sm:$0xf] %v283
      %292 = vst [vmem:[%s172 + $0xc] sm:$0xf] %v284
      %293 = vst [vmem:[%s172 + $0x10] sm:$0xf] %v285
      %294 = vst [vmem:[%s172 + $0x14] sm:$0xf] %v286
      %295 = vst [vmem:[%s172 + $0x18] sm:$0xf] %v287
      %296 = vst [vmem:[%s172 + $0x1c] sm:$0xf] %v288
      %s297 = smul.u32 8, %s14
      %p298 = scmp.lt.s32.totalorder %s297, 15
      %s299 = scalar_select %p298, %s297, 15
      %s300 = smul.addr %s299, 4
      %s301 = scalar_lea.vmem %s3, %s300
      // Predicated region
      $region33: #{encoder_decoder_forward.8} parent=31 // pred_check
        %p302 = pneg %p100
      $region34: #{encoder_decoder_forward.8} parent=31 // pred_check_branch
        %304 = sbr.rel (%p302) target = $region36
      $region35: #{encoder_decoder_forward.8} parent=31 // pred_region
        %s305 = smul.u32 8, %s14
      $region36: #{encoder_decoder_forward.8} parent=31 // pred_fallthru
        _
    $region32: #{encoder_decoder_forward.8} parent=5 // pred_fallthru
      _
    %p306 = scmp.le.s32.totalorder 2, %s9
    // Predicated region
    $region37: #{encoder_decoder_forward.8} parent=5 // pred_check
      %p307 = pneg %p306
    $region38: #{encoder_decoder_forward.8} parent=5 // pred_check_branch
      %309 = sbr.rel (%p307) target = $region40
    $region39: #{encoder_decoder_forward.8} parent=5 // pred_region
      %s310 = ssub.s32 %s9, 2
      // Predicated region
      $region41: #{encoder_decoder_forward.8} parent=39 // pred_check
        %p311 = pneg %p106
      $region42: #{encoder_decoder_forward.8} parent=39 // pred_check_branch
        %313 = sbr.rel (%p311) target = $region44
      $region43: #{encoder_decoder_forward.8} parent=39 // pred_region
        %s314 = smul.u32 8, %s15
        %p315 = scmp.lt.s32.totalorder %s314, 15
        %s316 = scalar_select %p315, %s314, 15
        %s317 = smul.addr %s316, 4
        %s318 = scalar_lea.vmem %s3, %s317
      $region44: #{encoder_decoder_forward.8} parent=39 // pred_fallthru
        _
    $region40: #{encoder_decoder_forward.8} parent=5 // pred_fallthru
      _
  $region6: #{encoder_decoder_forward.8} parent=0 // loop_footer
    %s13 = sadd.s32 1, %s9
  $region7: #{encoder_decoder_forward.8} parent=0 // loop_footer_branch
    %8 = sbr.rel target = $region3
  $region8: #{encoder_decoder_forward.8} parent=0 // loop_exit
    _

// kernel: encoder_decoder_forward.10
$region0: #{encoder_decoder_forward.10}
  #allocation0 [shape = 'u32[]', space=smem, size = 0x4, offset = 0x4, fixed_abs, tag = 'smem constant byte address 0x4 - core index']
  #allocation1 [shape = 'u32[72,128]{1,0:T(1,128)}', space=vmem, size = 0x9000, scoped, tag = 'internal scratch']
  %s0 = inlined_call_operand.vmem [shape: bf16[32,72], index: 0, kind: input, shape index: {}]
  %s1 = inlined_call_operand.vmem [shape: bf16[72,128], index: 1, kind: input, shape index: {}]
  %s2 = inlined_call_operand.vmem [shape: f32[1,128], index: 2, kind: input, shape index: {}]
  %s3 = inlined_call_operand.vmem [shape: bf16[32,128], index: 3, kind: output, shape index: {}]
  %s4 = sld [smem:[#allocation0]]
  $region45: #{encoder_decoder_forward.10} parent=0
    _
  %s6 = ssub.s32 1, %s4
  %s7 = scalar_select 0, %s6, %s4
  loop: start=0, step=1, limit=4
  $region2: #{encoder_decoder_forward.10} parent=0 // loop_pre_header
    _
  $region3: #{encoder_decoder_forward.10} parent=0 // loop_header
    %s9 = sphi 0, %s13
    %p10 = scmp.ge.s32.totalorder %s9, 4
    %s19 = sphi 0, %s21
    %s22 = sphi 0, %s19
    %s23 = sphi 0, %s22
    %s39 = sphi 0, %s23
    %s43 = sphi 0, %s43
    %s45 = sphi 0, %s43
    %s46 = sphi 0, %s45
    %s60 = sphi 0, %s46
    %s64 = sphi 0, %s64
    %s66 = sphi 0, %s64
    %s67 = sphi 0, %s66
    %s81 = sphi 0, %s67
    %s87 = sphi 0, %s89
    %s90 = sphi 0, %s87
    %s91 = sphi 0, %s90
    %s107 = sphi 0, %s91
  $region4: #{encoder_decoder_forward.10} parent=0 // loop_header_branch
    %12 = sbr.rel (%p10) target = $region8
  $region5: #{encoder_decoder_forward.10} parent=0 // loop_body
    %s14 = ssub.s32 %s9, 1
    %s15 = ssub.s32 %s9, 2
    %s16 = sadd.s32 %s9, 1
    %s17 = ssub.s32 %s9, %s16
    %p18 = scmp.eq.s32.totalorder %s17, 0
    %s20 = sadd.s32 %s19, 1
    %s21 = scalar_select %p18, %s19, %s20
    %p24 = pneg %p18
    %p25 = scmp.eq.s32.totalorder %s9, 1
    %p26 = por %p24, %p25
    %p27 = scmp.ne.s32.totalorder %s19, %s22
    %p28 = scmp.eq.s32.totalorder %s9, 0
    %p29 = por %p27, %p28
    %p30 = scmp.ne.s32.totalorder %s19, %s22
    %p31 = scmp.eq.s32.totalorder %s14, 1
    %p32 = por %p30, %p31
    %p33 = scmp.ne.s32.totalorder %s22, %s23
    %p34 = scmp.eq.s32.totalorder %s14, 0
    %p35 = por %p33, %p34
    %p36 = scmp.ne.s32.totalorder %s22, %s23
    %p37 = scmp.eq.s32.totalorder %s15, 1
    %p38 = por %p36, %p37
    %p40 = scmp.ne.s32.totalorder %s23, %s39
    %p41 = scmp.eq.s32.totalorder %s15, 0
    %p42 = por %p40, %p41
    %s44 = sadd.s32 %s43, 1
    %p47 = scmp.eq.s32.totalorder %s9, 1
    %p48 = scmp.ne.s32.totalorder %s43, %s45
    %p49 = scmp.eq.s32.totalorder %s9, 0
    %p50 = por %p48, %p49
    %p51 = scmp.ne.s32.totalorder %s43, %s45
    %p52 = scmp.eq.s32.totalorder %s14, 1
    %p53 = por %p51, %p52
    %p54 = scmp.ne.s32.totalorder %s45, %s46
    %p55 = scmp.eq.s32.totalorder %s14, 0
    %p56 = por %p54, %p55
    %p57 = scmp.ne.s32.totalorder %s45, %s46
    %p58 = scmp.eq.s32.totalorder %s15, 1
    %p59 = por %p57, %p58
    %p61 = scmp.ne.s32.totalorder %s46, %s60
    %p62 = scmp.eq.s32.totalorder %s15, 0
    %p63 = por %p61, %p62
    %s65 = sadd.s32 %s64, 1
    %p68 = scmp.eq.s32.totalorder %s9, 1
    %p69 = scmp.ne.s32.totalorder %s64, %s66
    %p70 = scmp.eq.s32.totalorder %s9, 0
    %p71 = por %p69, %p70
    %p72 = scmp.ne.s32.totalorder %s64, %s66
    %p73 = scmp.eq.s32.totalorder %s14, 1
    %p74 = por %p72, %p73
    %p75 = scmp.ne.s32.totalorder %s66, %s67
    %p76 = scmp.eq.s32.totalorder %s14, 0
    %p77 = por %p75, %p76
    %p78 = scmp.ne.s32.totalorder %s66, %s67
    %p79 = scmp.eq.s32.totalorder %s15, 1
    %p80 = por %p78, %p79
    %p82 = scmp.ne.s32.totalorder %s67, %s81
    %p83 = scmp.eq.s32.totalorder %s15, 0
    %p84 = por %p82, %p83
    %s85 = ssub.s32 %s9, %s16
    %p86 = scmp.eq.s32.totalorder %s85, 0
    %s88 = sadd.s32 %s87, 1
    %s89 = scalar_select %p86, %s87, %s88
    %p92 = pneg %p86
    %p93 = scmp.eq.s32.totalorder %s9, 1
    %p94 = por %p92, %p93
    %p95 = scmp.ne.s32.totalorder %s87, %s90
    %p96 = scmp.eq.s32.totalorder %s9, 0
    %p97 = por %p95, %p96
    %p98 = scmp.ne.s32.totalorder %s87, %s90
    %p99 = scmp.eq.s32.totalorder %s14, 1
    %p100 = por %p98, %p99
    %p101 = scmp.ne.s32.totalorder %s90, %s91
    %p102 = scmp.eq.s32.totalorder %s14, 0
    %p103 = por %p101, %p102
    %p104 = scmp.ne.s32.totalorder %s90, %s91
    %p105 = scmp.eq.s32.totalorder %s15, 1
    %p106 = por %p104, %p105
    %p108 = scmp.ne.s32.totalorder %s91, %s107
    %p109 = scmp.eq.s32.totalorder %s15, 0
    %p110 = por %p108, %p109
    %p111 = scmp.le.s32.totalorder 1, %s9
    %p112 = scmp.lt.s32.totalorder %s9, 3
    %p113 = pnand %p111, %p112
    %p114 = pneg %p113
    // Predicated region
    $region9: #{encoder_decoder_forward.10} parent=5 // pred_check
      _
    $region10: #{encoder_decoder_forward.10} parent=5 // pred_check_branch
      %116 = sbr.rel (%p113) target = $region12
    $region11: #{encoder_decoder_forward.10} parent=5 // pred_region
      %s117 = ssub.s32 %s9, 1
      // Predicated region
      $region13: #{encoder_decoder_forward.10} parent=11 // pred_check
        %p118 = pneg %p56
      $region14: #{encoder_decoder_forward.10} parent=11 // pred_check_branch
        %120 = sbr.rel (%p118) target = $region16
      $region15: #{encoder_decoder_forward.10} parent=11 // pred_region
        _
      $region16: #{encoder_decoder_forward.10} parent=11 // pred_fallthru
        _
      // Predicated region
      $region17: #{encoder_decoder_forward.10} parent=11 // pred_check
        %p121 = pneg %p77
      $region18: #{encoder_decoder_forward.10} parent=11 // pred_check_branch
        %123 = sbr.rel (%p121) target = $region20
      $region19: #{encoder_decoder_forward.10} parent=11 // pred_region
        _
      $region20: #{encoder_decoder_forward.10} parent=11 // pred_fallthru
        _
    $region12: #{encoder_decoder_forward.10} parent=5 // pred_fallthru
      _
    %p124 = scmp.lt.s32.totalorder %s9, 2
    // Predicated region
    $region21: #{encoder_decoder_forward.10} parent=5 // pred_check
      %p125 = pneg %p124
    $region22: #{encoder_decoder_forward.10} parent=5 // pred_check_branch
      %127 = sbr.rel (%p125) target = $region24
    $region23: #{encoder_decoder_forward.10} parent=5 // pred_region
      // Predicated region
      $region25: #{encoder_decoder_forward.10} parent=23 // pred_check
        %p128 = pneg %p29
      $region26: #{encoder_decoder_forward.10} parent=23 // pred_check_branch
        %130 = sbr.rel (%p128) target = $region28
      $region27: #{encoder_decoder_forward.10} parent=23 // pred_region
        %s131 = smul.u32 2, %s9
        %p132 = scmp.lt.s32.totalorder %s131, 3
        %s133 = scalar_select %p132, %s131, 3
        %s134 = smul.addr %s133, 4
        %s135 = scalar_lea.vmem %s0, %s134
        %s136 = smul.u32 2, %s9
      $region28: #{encoder_decoder_forward.10} parent=23 // pred_fallthru
        _
    $region24: #{encoder_decoder_forward.10} parent=5 // pred_fallthru
      _
    %p137 = scmp.le.s32.totalorder 1, %s9
    %p138 = scmp.lt.s32.totalorder %s9, 3
    %p139 = pnand %p137, %p138
    %p140 = pneg %p139
    // Predicated region
    $region29: #{encoder_decoder_forward.10} parent=5 // pred_check
      _
    $region30: #{encoder_decoder_forward.10} parent=5 // pred_check_branch
      %142 = sbr.rel (%p139) target = $region32
    $region31: #{encoder_decoder_forward.10} parent=5 // pred_region
      %s143 = ssub.s32 %s9, 1
      %s144 = smul.u32 2, %s14
      %p145 = scmp.lt.s32.totalorder %s144, 3
      %s146 = scalar_select %p145, %s144, 3
      %s147 = smul.addr %s146, 4
      %s148 = scalar_lea.vmem %s0, %s147
      %p149 = pneg %p35
      %p150 = pneg %p32
      %p151 = pneg %p56
      %p152 = pneg %p53
      %p153 = pneg %p77
      %p154 = pneg %p74
      %p155 = pneg %p103
      %p156 = pneg %p100
      %s157 = smul.u32 2, %s14
      %p158 = scmp.lt.s32.totalorder %s157, 3
      %s159 = scalar_select %p158, %s157, 3
      %s160 = smul.addr %s159, 4
      %s161 = scalar_lea.vmem %s3, %s160
      %s162 = smul.u32 2, %s14
      %p163 = scmp.lt.s32.totalorder %s162, 3
      %s164 = scalar_select %p163, %s162, 3
      %s165 = smul.addr %s164, 4
      %s166 = scalar_lea.vmem %s0, %s165
      %s167 = smul.u32 2, %s14
      %s168 = smul.u32 2, %s14
      %p169 = scmp.lt.s32.totalorder %s168, 3
      %s170 = scalar_select %p169, %s168, 3
      %s171 = smul.addr %s170, 4
      %s172 = scalar_lea.vmem %s3, %s171
      %s173 = smul.u32 2, %s14
      %v175 = vld [vmem:[%s166] sm:$0xf]
      %v176 = vld [vmem:[%s166 + $0x4] sm:$0xf]
      %v177 = vld [vmem:[%s1] sm:$0xf]
      %v178 = vld [vmem:[%s1 + $0x4] sm:$0xf]
      %v179 = vld [vmem:[%s1 + $0x8] sm:$0xf]
      %v180 = vld [vmem:[%s1 + $0xc] sm:$0xf]
      %v181 = vld [vmem:[%s1 + $0x10] sm:$0xf]
      %v182 = vld [vmem:[%s1 + $0x14] sm:$0xf]
      %v183 = vld [vmem:[%s1 + $0x18] sm:$0xf]
      %v184 = vld [vmem:[%s1 + $0x1c] sm:$0xf]
      %v185 = vld [vmem:[%s1 + $0x20] sm:$0xf]
      %v186 = vld [vmem:[%s2] sm:$0x1]
      %v188 = vperm.slane %v186, 0
      %v192 = vunpack.c.l.b16 %v175
      %v193 = vunpack.c.l.b16 %v176
      %v194 = vpack.c.b16 %v193, %v192
      %v204 = vunpack.c.l.b16 %v177
      %v205 = vunpack.c.l.b16 %v178
      %v206 = vunpack.c.l.b16 %v179
      %v207 = vunpack.c.l.b16 %v180
      %v208 = vunpack.c.l.b16 %v181
      %v209 = vunpack.c.l.b16 %v182
      %v210 = vunpack.c.l.b16 %v183
      %v211 = vunpack.c.l.b16 %v184
      %v212 = vunpack.c.l.b16 %v185
      %v213 = vpack.c.b16 %v205, %v204
      %v214 = vpack.c.b16 %v207, %v206
      %v215 = vpack.c.b16 %v209, %v208
      %v216 = vpack.c.b16 %v211, %v210
      %v217 = vpack.c.b16 %v212, %v212
      %vm222 = vcmask 588800
      %v224 = vsel %vm222, %v194, 0
      %vm226 = vcmask 1043456
      %v228 = vsel %vm226, %v217, 0
      %230 = vmatpush.bf16.msra.mxu0 0
      %231 = vmatpush.bf16.msra.mxu0 0
      %232 = vmatpush.bf16.msra.mxu0 0
      %233 = vmatpush.bf16.msra.mxu0 %v228
      %234 = vmatpush.bf16.msra.mxu0 %v216
      %235 = vmatpush.bf16.msra.mxu0 %v215
      %236 = vmatpush.bf16.msra.mxu0 %v214
      %237 = vmatpush.bf16.msra.mxu0 %v213
      %238 = vmatmul.bf16.gmra.mxu0 %v224
      %v239 = vpop.f32.mrf.mxu0
      %v240 = vadd.f32 %v188, %v239
      %v241 = vpop.f32.mrf.mxu0
      %v242 = vadd.f32 %v188, %v241
      %243 = vdwg.mxu0
      %v244 = vmax.f32 %v240, 0.0
      %v245 = vmax.f32 %v242, 0.0
      %v246 = vpack.c.bf16 %v244, %v244
      %v247 = vpack.c.bf16 %v245, %v245
      %248 = vst [vmem:[%s172] sm:$0xf] %v246
      %249 = vst [vmem:[%s172 + $0x4] sm:$0xf] %v247
      %s250 = smul.u32 2, %s14
      %p251 = scmp.lt.s32.totalorder %s250, 3
      %s252 = scalar_select %p251, %s250, 3
      %s253 = smul.addr %s252, 4
      %s254 = scalar_lea.vmem %s3, %s253
      // Predicated region
      $region33: #{encoder_decoder_forward.10} parent=31 // pred_check
        %p255 = pneg %p100
      $region34: #{encoder_decoder_forward.10} parent=31 // pred_check_branch
        %257 = sbr.rel (%p255) target = $region36
      $region35: #{encoder_decoder_forward.10} parent=31 // pred_region
        %s258 = smul.u32 2, %s14
      $region36: #{encoder_decoder_forward.10} parent=31 // pred_fallthru
        _
    $region32: #{encoder_decoder_forward.10} parent=5 // pred_fallthru
      _
    %p259 = scmp.le.s32.totalorder 2, %s9
    // Predicated region
    $region37: #{encoder_decoder_forward.10} parent=5 // pred_check
      %p260 = pneg %p259
    $region38: #{encoder_decoder_forward.10} parent=5 // pred_check_branch
      %262 = sbr.rel (%p260) target = $region40
    $region39: #{encoder_decoder_forward.10} parent=5 // pred_region
      %s263 = ssub.s32 %s9, 2
      // Predicated region
      $region41: #{encoder_decoder_forward.10} parent=39 // pred_check
        %p264 = pneg %p106
      $region42: #{encoder_decoder_forward.10} parent=39 // pred_check_branch
        %266 = sbr.rel (%p264) target = $region44
      $region43: #{encoder_decoder_forward.10} parent=39 // pred_region
        %s267 = smul.u32 2, %s15
        %p268 = scmp.lt.s32.totalorder %s267, 3
        %s269 = scalar_select %p268, %s267, 3
        %s270 = smul.addr %s269, 4
        %s271 = scalar_lea.vmem %s3, %s270
      $region44: #{encoder_decoder_forward.10} parent=39 // pred_fallthru
        _
    $region40: #{encoder_decoder_forward.10} parent=5 // pred_fallthru
      _
  $region6: #{encoder_decoder_forward.10} parent=0 // loop_footer
    %s13 = sadd.s32 1, %s9
  $region7: #{encoder_decoder_forward.10} parent=0 // loop_footer_branch
    %8 = sbr.rel target = $region3
  $region8: #{encoder_decoder_forward.10} parent=0 // loop_exit
    _

// kernel: encoder_decoder_forward.12
$region0: #{encoder_decoder_forward.12}
  #allocation0 [shape = 'u32[]', space=smem, size = 0x4, offset = 0x4, fixed_abs, tag = 'smem constant byte address 0x4 - core index']
  #allocation1 [shape = 'u32[72,128]{1,0:T(1,128)}', space=vmem, size = 0x9000, scoped, tag = 'internal scratch']
  %s0 = inlined_call_operand.vmem [shape: bf16[32,16], index: 0, kind: input, shape index: {}]
  %s1 = inlined_call_operand.vmem [shape: bf16[16,128], index: 1, kind: input, shape index: {}]
  %s2 = inlined_call_operand.vmem [shape: f32[1,128], index: 2, kind: input, shape index: {}]
  %s3 = inlined_call_operand.vmem [shape: bf16[32,128], index: 3, kind: output, shape index: {}]
  %s4 = sld [smem:[#allocation0]]
  $region45: #{encoder_decoder_forward.12} parent=0
    _
  %s6 = ssub.s32 1, %s4
  %s7 = scalar_select 0, %s6, %s4
  loop: start=0, step=1, limit=4
  $region2: #{encoder_decoder_forward.12} parent=0 // loop_pre_header
    _
  $region3: #{encoder_decoder_forward.12} parent=0 // loop_header
    %s9 = sphi 0, %s13
    %p10 = scmp.ge.s32.totalorder %s9, 4
    %s19 = sphi 0, %s21
    %s22 = sphi 0, %s19
    %s23 = sphi 0, %s22
    %s39 = sphi 0, %s23
    %s43 = sphi 0, %s43
    %s45 = sphi 0, %s43
    %s46 = sphi 0, %s45
    %s60 = sphi 0, %s46
    %s64 = sphi 0, %s64
    %s66 = sphi 0, %s64
    %s67 = sphi 0, %s66
    %s81 = sphi 0, %s67
    %s87 = sphi 0, %s89
    %s90 = sphi 0, %s87
    %s91 = sphi 0, %s90
    %s107 = sphi 0, %s91
  $region4: #{encoder_decoder_forward.12} parent=0 // loop_header_branch
    %12 = sbr.rel (%p10) target = $region8
  $region5: #{encoder_decoder_forward.12} parent=0 // loop_body
    %s14 = ssub.s32 %s9, 1
    %s15 = ssub.s32 %s9, 2
    %s16 = sadd.s32 %s9, 1
    %s17 = ssub.s32 %s9, %s16
    %p18 = scmp.eq.s32.totalorder %s17, 0
    %s20 = sadd.s32 %s19, 1
    %s21 = scalar_select %p18, %s19, %s20
    %p24 = pneg %p18
    %p25 = scmp.eq.s32.totalorder %s9, 1
    %p26 = por %p24, %p25
    %p27 = scmp.ne.s32.totalorder %s19, %s22
    %p28 = scmp.eq.s32.totalorder %s9, 0
    %p29 = por %p27, %p28
    %p30 = scmp.ne.s32.totalorder %s19, %s22
    %p31 = scmp.eq.s32.totalorder %s14, 1
    %p32 = por %p30, %p31
    %p33 = scmp.ne.s32.totalorder %s22, %s23
    %p34 = scmp.eq.s32.totalorder %s14, 0
    %p35 = por %p33, %p34
    %p36 = scmp.ne.s32.totalorder %s22, %s23
    %p37 = scmp.eq.s32.totalorder %s15, 1
    %p38 = por %p36, %p37
    %p40 = scmp.ne.s32.totalorder %s23, %s39
    %p41 = scmp.eq.s32.totalorder %s15, 0
    %p42 = por %p40, %p41
    %s44 = sadd.s32 %s43, 1
    %p47 = scmp.eq.s32.totalorder %s9, 1
    %p48 = scmp.ne.s32.totalorder %s43, %s45
    %p49 = scmp.eq.s32.totalorder %s9, 0
    %p50 = por %p48, %p49
    %p51 = scmp.ne.s32.totalorder %s43, %s45
    %p52 = scmp.eq.s32.totalorder %s14, 1
    %p53 = por %p51, %p52
    %p54 = scmp.ne.s32.totalorder %s45, %s46
    %p55 = scmp.eq.s32.totalorder %s14, 0
    %p56 = por %p54, %p55
    %p57 = scmp.ne.s32.totalorder %s45, %s46
    %p58 = scmp.eq.s32.totalorder %s15, 1
    %p59 = por %p57, %p58
    %p61 = scmp.ne.s32.totalorder %s46, %s60
    %p62 = scmp.eq.s32.totalorder %s15, 0
    %p63 = por %p61, %p62
    %s65 = sadd.s32 %s64, 1
    %p68 = scmp.eq.s32.totalorder %s9, 1
    %p69 = scmp.ne.s32.totalorder %s64, %s66
    %p70 = scmp.eq.s32.totalorder %s9, 0
    %p71 = por %p69, %p70
    %p72 = scmp.ne.s32.totalorder %s64, %s66
    %p73 = scmp.eq.s32.totalorder %s14, 1
    %p74 = por %p72, %p73
    %p75 = scmp.ne.s32.totalorder %s66, %s67
    %p76 = scmp.eq.s32.totalorder %s14, 0
    %p77 = por %p75, %p76
    %p78 = scmp.ne.s32.totalorder %s66, %s67
    %p79 = scmp.eq.s32.totalorder %s15, 1
    %p80 = por %p78, %p79
    %p82 = scmp.ne.s32.totalorder %s67, %s81
    %p83 = scmp.eq.s32.totalorder %s15, 0
    %p84 = por %p82, %p83
    %s85 = ssub.s32 %s9, %s16
    %p86 = scmp.eq.s32.totalorder %s85, 0
    %s88 = sadd.s32 %s87, 1
    %s89 = scalar_select %p86, %s87, %s88
    %p92 = pneg %p86
    %p93 = scmp.eq.s32.totalorder %s9, 1
    %p94 = por %p92, %p93
    %p95 = scmp.ne.s32.totalorder %s87, %s90
    %p96 = scmp.eq.s32.totalorder %s9, 0
    %p97 = por %p95, %p96
    %p98 = scmp.ne.s32.totalorder %s87, %s90
    %p99 = scmp.eq.s32.totalorder %s14, 1
    %p100 = por %p98, %p99
    %p101 = scmp.ne.s32.totalorder %s90, %s91
    %p102 = scmp.eq.s32.totalorder %s14, 0
    %p103 = por %p101, %p102
    %p104 = scmp.ne.s32.totalorder %s90, %s91
    %p105 = scmp.eq.s32.totalorder %s15, 1
    %p106 = por %p104, %p105
    %p108 = scmp.ne.s32.totalorder %s91, %s107
    %p109 = scmp.eq.s32.totalorder %s15, 0
    %p110 = por %p108, %p109
    %p111 = scmp.le.s32.totalorder 1, %s9
    %p112 = scmp.lt.s32.totalorder %s9, 3
    %p113 = pnand %p111, %p112
    %p114 = pneg %p113
    // Predicated region
    $region9: #{encoder_decoder_forward.12} parent=5 // pred_check
      _
    $region10: #{encoder_decoder_forward.12} parent=5 // pred_check_branch
      %116 = sbr.rel (%p113) target = $region12
    $region11: #{encoder_decoder_forward.12} parent=5 // pred_region
      %s117 = ssub.s32 %s9, 1
      // Predicated region
      $region13: #{encoder_decoder_forward.12} parent=11 // pred_check
        %p118 = pneg %p56
      $region14: #{encoder_decoder_forward.12} parent=11 // pred_check_branch
        %120 = sbr.rel (%p118) target = $region16
      $region15: #{encoder_decoder_forward.12} parent=11 // pred_region
        _
      $region16: #{encoder_decoder_forward.12} parent=11 // pred_fallthru
        _
      // Predicated region
      $region17: #{encoder_decoder_forward.12} parent=11 // pred_check
        %p121 = pneg %p77
      $region18: #{encoder_decoder_forward.12} parent=11 // pred_check_branch
        %123 = sbr.rel (%p121) target = $region20
      $region19: #{encoder_decoder_forward.12} parent=11 // pred_region
        _
      $region20: #{encoder_decoder_forward.12} parent=11 // pred_fallthru
        _
    $region12: #{encoder_decoder_forward.12} parent=5 // pred_fallthru
      _
    %p124 = scmp.lt.s32.totalorder %s9, 2
    // Predicated region
    $region21: #{encoder_decoder_forward.12} parent=5 // pred_check
      %p125 = pneg %p124
    $region22: #{encoder_decoder_forward.12} parent=5 // pred_check_branch
      %127 = sbr.rel (%p125) target = $region24
    $region23: #{encoder_decoder_forward.12} parent=5 // pred_region
      // Predicated region
      $region25: #{encoder_decoder_forward.12} parent=23 // pred_check
        %p128 = pneg %p29
      $region26: #{encoder_decoder_forward.12} parent=23 // pred_check_branch
        %130 = sbr.rel (%p128) target = $region28
      $region27: #{encoder_decoder_forward.12} parent=23 // pred_region
        %s131 = smul.u32 2, %s9
        %p132 = scmp.lt.s32.totalorder %s131, 3
        %s133 = scalar_select %p132, %s131, 3
        %s134 = smul.addr %s133, 4
        %s135 = scalar_lea.vmem %s0, %s134
        %s136 = smul.u32 2, %s9
      $region28: #{encoder_decoder_forward.12} parent=23 // pred_fallthru
        _
    $region24: #{encoder_decoder_forward.12} parent=5 // pred_fallthru
      _
    %p137 = scmp.le.s32.totalorder 1, %s9
    %p138 = scmp.lt.s32.totalorder %s9, 3
    %p139 = pnand %p137, %p138
    %p140 = pneg %p139
    // Predicated region
    $region29: #{encoder_decoder_forward.12} parent=5 // pred_check
      _
    $region30: #{encoder_decoder_forward.12} parent=5 // pred_check_branch
      %142 = sbr.rel (%p139) target = $region32
    $region31: #{encoder_decoder_forward.12} parent=5 // pred_region
      %s143 = ssub.s32 %s9, 1
      %s144 = smul.u32 2, %s14
      %p145 = scmp.lt.s32.totalorder %s144, 3
      %s146 = scalar_select %p145, %s144, 3
      %s147 = smul.addr %s146, 4
      %s148 = scalar_lea.vmem %s0, %s147
      %p149 = pneg %p35
      %p150 = pneg %p32
      %p151 = pneg %p56
      %p152 = pneg %p53
      %p153 = pneg %p77
      %p154 = pneg %p74
      %p155 = pneg %p103
      %p156 = pneg %p100
      %s157 = smul.u32 2, %s14
      %p158 = scmp.lt.s32.totalorder %s157, 3
      %s159 = scalar_select %p158, %s157, 3
      %s160 = smul.addr %s159, 4
      %s161 = scalar_lea.vmem %s3, %s160
      %s162 = smul.u32 2, %s14
      %p163 = scmp.lt.s32.totalorder %s162, 3
      %s164 = scalar_select %p163, %s162, 3
      %s165 = smul.addr %s164, 4
      %s166 = scalar_lea.vmem %s0, %s165
      %s167 = smul.u32 2, %s14
      %s168 = smul.u32 2, %s14
      %p169 = scmp.lt.s32.totalorder %s168, 3
      %s170 = scalar_select %p169, %s168, 3
      %s171 = smul.addr %s170, 4
      %s172 = scalar_lea.vmem %s3, %s171
      %s173 = smul.u32 2, %s14
      %v175 = vld [vmem:[%s166] sm:$0xf]
      %v176 = vld [vmem:[%s166 + $0x4] sm:$0xf]
      %v177 = vld [vmem:[%s1] sm:$0xf]
      %v178 = vld [vmem:[%s1 + $0x4] sm:$0xf]
      %v179 = vld [vmem:[%s2] sm:$0x1]
      %v181 = vperm.slane %v179, 0
      %v185 = vunpack.c.l.b16 %v175
      %v186 = vunpack.c.l.b16 %v176
      %v187 = vpack.c.b16 %v186, %v185
      %v190 = vunpack.c.l.b16 %v177
      %v191 = vunpack.c.l.b16 %v178
      %v192 = vpack.c.b16 %v191, %v190
      %vm194 = vcmask 130048
      %v196 = vsel %vm194, %v187, 0
      %198 = vmatpush.bf16.msra.mxu0 0
      %199 = vmatpush.bf16.msra.mxu0 0
      %200 = vmatpush.bf16.msra.mxu0 0
      %201 = vmatpush.bf16.msra.mxu0 0
      %202 = vmatpush.bf16.msra.mxu0 0
      %203 = vmatpush.bf16.msra.mxu0 0
      %204 = vmatpush.bf16.msra.mxu0 0
      %205 = vmatpush.bf16.msra.mxu0 %v192
      %206 = vmatmul.bf16.gmra.mxu0 %v196
      %v207 = vpop.f32.mrf.mxu0
      %v208 = vadd.f32 %v181, %v207
      %v209 = vpop.f32.mrf.mxu0
      %v210 = vadd.f32 %v181, %v209
      %211 = vdwg.mxu0
      %v212 = vmax.f32 %v208, 0.0
      %v213 = vmax.f32 %v210, 0.0
      %v214 = vpack.c.bf16 %v212, %v212
      %v215 = vpack.c.bf16 %v213, %v213
      %216 = vst [vmem:[%s172] sm:$0xf] %v214
      %217 = vst [vmem:[%s172 + $0x4] sm:$0xf] %v215
      %s218 = smul.u32 2, %s14
      %p219 = scmp.lt.s32.totalorder %s218, 3
      %s220 = scalar_select %p219, %s218, 3
      %s221 = smul.addr %s220, 4
      %s222 = scalar_lea.vmem %s3, %s221
      // Predicated region
      $region33: #{encoder_decoder_forward.12} parent=31 // pred_check
        %p223 = pneg %p100
      $region34: #{encoder_decoder_forward.12} parent=31 // pred_check_branch
        %225 = sbr.rel (%p223) target = $region36
      $region35: #{encoder_decoder_forward.12} parent=31 // pred_region
        %s226 = smul.u32 2, %s14
      $region36: #{encoder_decoder_forward.12} parent=31 // pred_fallthru
        _
    $region32: #{encoder_decoder_forward.12} parent=5 // pred_fallthru
      _
    %p227 = scmp.le.s32.totalorder 2, %s9
    // Predicated region
    $region37: #{encoder_decoder_forward.12} parent=5 // pred_check
      %p228 = pneg %p227
    $region38: #{encoder_decoder_forward.12} parent=5 // pred_check_branch
      %230 = sbr.rel (%p228) target = $region40
    $region39: #{encoder_decoder_forward.12} parent=5 // pred_region
      %s231 = ssub.s32 %s9, 2
      // Predicated region
      $region41: #{encoder_decoder_forward.12} parent=39 // pred_check
        %p232 = pneg %p106
      $region42: #{encoder_decoder_forward.12} parent=39 // pred_check_branch
        %234 = sbr.rel (%p232) target = $region44
      $region43: #{encoder_decoder_forward.12} parent=39 // pred_region
        %s235 = smul.u32 2, %s15
        %p236 = scmp.lt.s32.totalorder %s235, 3
        %s237 = scalar_select %p236, %s235, 3
        %s238 = smul.addr %s237, 4
        %s239 = scalar_lea.vmem %s3, %s238
      $region44: #{encoder_decoder_forward.12} parent=39 // pred_fallthru
        _
    $region40: #{encoder_decoder_forward.12} parent=5 // pred_fallthru
      _
  $region6: #{encoder_decoder_forward.12} parent=0 // loop_footer
    %s13 = sadd.s32 1, %s9
  $region7: #{encoder_decoder_forward.12} parent=0 // loop_footer_branch
    %8 = sbr.rel target = $region3
  $region8: #{encoder_decoder_forward.12} parent=0 // loop_exit
    _

// kernel: encoder_decoder_forward.13
$region0: #{encoder_decoder_forward.13}
  #allocation0 [shape = 'u32[]', space=smem, size = 0x4, offset = 0x4, fixed_abs, tag = 'smem constant byte address 0x4 - core index']
  #allocation1 [shape = 'u32[72,128]{1,0:T(1,128)}', space=vmem, size = 0x9000, scoped, tag = 'internal scratch']
  %s0 = inlined_call_operand.vmem [shape: bf16[128,72], index: 0, kind: input, shape index: {}]
  %s1 = inlined_call_operand.vmem [shape: bf16[72,128], index: 1, kind: input, shape index: {}]
  %s2 = inlined_call_operand.vmem [shape: f32[1,128], index: 2, kind: input, shape index: {}]
  %s3 = inlined_call_operand.vmem [shape: bf16[128,128], index: 3, kind: output, shape index: {}]
  %s4 = sld [smem:[#allocation0]]
  $region45: #{encoder_decoder_forward.13} parent=0
    _
  %s6 = ssub.s32 1, %s4
  %s7 = scalar_select 0, %s6, %s4
  loop: start=0, step=1, limit=4
  $region2: #{encoder_decoder_forward.13} parent=0 // loop_pre_header
    _
  $region3: #{encoder_decoder_forward.13} parent=0 // loop_header
    %s9 = sphi 0, %s13
    %p10 = scmp.ge.s32.totalorder %s9, 4
    %s19 = sphi 0, %s21
    %s22 = sphi 0, %s19
    %s23 = sphi 0, %s22
    %s39 = sphi 0, %s23
    %s43 = sphi 0, %s43
    %s45 = sphi 0, %s43
    %s46 = sphi 0, %s45
    %s60 = sphi 0, %s46
    %s64 = sphi 0, %s64
    %s66 = sphi 0, %s64
    %s67 = sphi 0, %s66
    %s81 = sphi 0, %s67
    %s87 = sphi 0, %s89
    %s90 = sphi 0, %s87
    %s91 = sphi 0, %s90
    %s107 = sphi 0, %s91
  $region4: #{encoder_decoder_forward.13} parent=0 // loop_header_branch
    %12 = sbr.rel (%p10) target = $region8
  $region5: #{encoder_decoder_forward.13} parent=0 // loop_body
    %s14 = ssub.s32 %s9, 1
    %s15 = ssub.s32 %s9, 2
    %s16 = sadd.s32 %s9, 1
    %s17 = ssub.s32 %s9, %s16
    %p18 = scmp.eq.s32.totalorder %s17, 0
    %s20 = sadd.s32 %s19, 1
    %s21 = scalar_select %p18, %s19, %s20
    %p24 = pneg %p18
    %p25 = scmp.eq.s32.totalorder %s9, 1
    %p26 = por %p24, %p25
    %p27 = scmp.ne.s32.totalorder %s19, %s22
    %p28 = scmp.eq.s32.totalorder %s9, 0
    %p29 = por %p27, %p28
    %p30 = scmp.ne.s32.totalorder %s19, %s22
    %p31 = scmp.eq.s32.totalorder %s14, 1
    %p32 = por %p30, %p31
    %p33 = scmp.ne.s32.totalorder %s22, %s23
    %p34 = scmp.eq.s32.totalorder %s14, 0
    %p35 = por %p33, %p34
    %p36 = scmp.ne.s32.totalorder %s22, %s23
    %p37 = scmp.eq.s32.totalorder %s15, 1
    %p38 = por %p36, %p37
    %p40 = scmp.ne.s32.totalorder %s23, %s39
    %p41 = scmp.eq.s32.totalorder %s15, 0
    %p42 = por %p40, %p41
    %s44 = sadd.s32 %s43, 1
    %p47 = scmp.eq.s32.totalorder %s9, 1
    %p48 = scmp.ne.s32.totalorder %s43, %s45
    %p49 = scmp.eq.s32.totalorder %s9, 0
    %p50 = por %p48, %p49
    %p51 = scmp.ne.s32.totalorder %s43, %s45
    %p52 = scmp.eq.s32.totalorder %s14, 1
    %p53 = por %p51, %p52
    %p54 = scmp.ne.s32.totalorder %s45, %s46
    %p55 = scmp.eq.s32.totalorder %s14, 0
    %p56 = por %p54, %p55
    %p57 = scmp.ne.s32.totalorder %s45, %s46
    %p58 = scmp.eq.s32.totalorder %s15, 1
    %p59 = por %p57, %p58
    %p61 = scmp.ne.s32.totalorder %s46, %s60
    %p62 = scmp.eq.s32.totalorder %s15, 0
    %p63 = por %p61, %p62
    %s65 = sadd.s32 %s64, 1
    %p68 = scmp.eq.s32.totalorder %s9, 1
    %p69 = scmp.ne.s32.totalorder %s64, %s66
    %p70 = scmp.eq.s32.totalorder %s9, 0
    %p71 = por %p69, %p70
    %p72 = scmp.ne.s32.totalorder %s64, %s66
    %p73 = scmp.eq.s32.totalorder %s14, 1
    %p74 = por %p72, %p73
    %p75 = scmp.ne.s32.totalorder %s66, %s67
    %p76 = scmp.eq.s32.totalorder %s14, 0
    %p77 = por %p75, %p76
    %p78 = scmp.ne.s32.totalorder %s66, %s67
    %p79 = scmp.eq.s32.totalorder %s15, 1
    %p80 = por %p78, %p79
    %p82 = scmp.ne.s32.totalorder %s67, %s81
    %p83 = scmp.eq.s32.totalorder %s15, 0
    %p84 = por %p82, %p83
    %s85 = ssub.s32 %s9, %s16
    %p86 = scmp.eq.s32.totalorder %s85, 0
    %s88 = sadd.s32 %s87, 1
    %s89 = scalar_select %p86, %s87, %s88
    %p92 = pneg %p86
    %p93 = scmp.eq.s32.totalorder %s9, 1
    %p94 = por %p92, %p93
    %p95 = scmp.ne.s32.totalorder %s87, %s90
    %p96 = scmp.eq.s32.totalorder %s9, 0
    %p97 = por %p95, %p96
    %p98 = scmp.ne.s32.totalorder %s87, %s90
    %p99 = scmp.eq.s32.totalorder %s14, 1
    %p100 = por %p98, %p99
    %p101 = scmp.ne.s32.totalorder %s90, %s91
    %p102 = scmp.eq.s32.totalorder %s14, 0
    %p103 = por %p101, %p102
    %p104 = scmp.ne.s32.totalorder %s90, %s91
    %p105 = scmp.eq.s32.totalorder %s15, 1
    %p106 = por %p104, %p105
    %p108 = scmp.ne.s32.totalorder %s91, %s107
    %p109 = scmp.eq.s32.totalorder %s15, 0
    %p110 = por %p108, %p109
    %p111 = scmp.le.s32.totalorder 1, %s9
    %p112 = scmp.lt.s32.totalorder %s9, 3
    %p113 = pnand %p111, %p112
    %p114 = pneg %p113
    // Predicated region
    $region9: #{encoder_decoder_forward.13} parent=5 // pred_check
      _
    $region10: #{encoder_decoder_forward.13} parent=5 // pred_check_branch
      %116 = sbr.rel (%p113) target = $region12
    $region11: #{encoder_decoder_forward.13} parent=5 // pred_region
      %s117 = ssub.s32 %s9, 1
      // Predicated region
      $region13: #{encoder_decoder_forward.13} parent=11 // pred_check
        %p118 = pneg %p56
      $region14: #{encoder_decoder_forward.13} parent=11 // pred_check_branch
        %120 = sbr.rel (%p118) target = $region16
      $region15: #{encoder_decoder_forward.13} parent=11 // pred_region
        _
      $region16: #{encoder_decoder_forward.13} parent=11 // pred_fallthru
        _
      // Predicated region
      $region17: #{encoder_decoder_forward.13} parent=11 // pred_check
        %p121 = pneg %p77
      $region18: #{encoder_decoder_forward.13} parent=11 // pred_check_branch
        %123 = sbr.rel (%p121) target = $region20
      $region19: #{encoder_decoder_forward.13} parent=11 // pred_region
        _
      $region20: #{encoder_decoder_forward.13} parent=11 // pred_fallthru
        _
    $region12: #{encoder_decoder_forward.13} parent=5 // pred_fallthru
      _
    %p124 = scmp.lt.s32.totalorder %s9, 2
    // Predicated region
    $region21: #{encoder_decoder_forward.13} parent=5 // pred_check
      %p125 = pneg %p124
    $region22: #{encoder_decoder_forward.13} parent=5 // pred_check_branch
      %127 = sbr.rel (%p125) target = $region24
    $region23: #{encoder_decoder_forward.13} parent=5 // pred_region
      // Predicated region
      $region25: #{encoder_decoder_forward.13} parent=23 // pred_check
        %p128 = pneg %p29
      $region26: #{encoder_decoder_forward.13} parent=23 // pred_check_branch
        %130 = sbr.rel (%p128) target = $region28
      $region27: #{encoder_decoder_forward.13} parent=23 // pred_region
        %s131 = smul.u32 8, %s9
        %p132 = scmp.lt.s32.totalorder %s131, 15
        %s133 = scalar_select %p132, %s131, 15
        %s134 = smul.addr %s133, 4
        %s135 = scalar_lea.vmem %s0, %s134
        %s136 = smul.u32 8, %s9
      $region28: #{encoder_decoder_forward.13} parent=23 // pred_fallthru
        _
    $region24: #{encoder_decoder_forward.13} parent=5 // pred_fallthru
      _
    %p137 = scmp.le.s32.totalorder 1, %s9
    %p138 = scmp.lt.s32.totalorder %s9, 3
    %p139 = pnand %p137, %p138
    %p140 = pneg %p139
    // Predicated region
    $region29: #{encoder_decoder_forward.13} parent=5 // pred_check
      _
    $region30: #{encoder_decoder_forward.13} parent=5 // pred_check_branch
      %142 = sbr.rel (%p139) target = $region32
    $region31: #{encoder_decoder_forward.13} parent=5 // pred_region
      %s143 = ssub.s32 %s9, 1
      %s144 = smul.u32 8, %s14
      %p145 = scmp.lt.s32.totalorder %s144, 15
      %s146 = scalar_select %p145, %s144, 15
      %s147 = smul.addr %s146, 4
      %s148 = scalar_lea.vmem %s0, %s147
      %p149 = pneg %p35
      %p150 = pneg %p32
      %p151 = pneg %p56
      %p152 = pneg %p53
      %p153 = pneg %p77
      %p154 = pneg %p74
      %p155 = pneg %p103
      %p156 = pneg %p100
      %s157 = smul.u32 8, %s14
      %p158 = scmp.lt.s32.totalorder %s157, 15
      %s159 = scalar_select %p158, %s157, 15
      %s160 = smul.addr %s159, 4
      %s161 = scalar_lea.vmem %s3, %s160
      %s162 = smul.u32 8, %s14
      %p163 = scmp.lt.s32.totalorder %s162, 15
      %s164 = scalar_select %p163, %s162, 15
      %s165 = smul.addr %s164, 4
      %s166 = scalar_lea.vmem %s0, %s165
      %s167 = smul.u32 8, %s14
      %s168 = smul.u32 8, %s14
      %p169 = scmp.lt.s32.totalorder %s168, 15
      %s170 = scalar_select %p169, %s168, 15
      %s171 = smul.addr %s170, 4
      %s172 = scalar_lea.vmem %s3, %s171
      %s173 = smul.u32 8, %s14
      %v175 = vld [vmem:[%s166] sm:$0xf]
      %v176 = vld [vmem:[%s166 + $0x4] sm:$0xf]
      %v177 = vld [vmem:[%s166 + $0x8] sm:$0xf]
      %v178 = vld [vmem:[%s166 + $0xc] sm:$0xf]
      %v179 = vld [vmem:[%s166 + $0x10] sm:$0xf]
      %v180 = vld [vmem:[%s166 + $0x14] sm:$0xf]
      %v181 = vld [vmem:[%s166 + $0x18] sm:$0xf]
      %v182 = vld [vmem:[%s166 + $0x1c] sm:$0xf]
      %v183 = vld [vmem:[%s1] sm:$0xf]
      %v184 = vld [vmem:[%s1 + $0x4] sm:$0xf]
      %v185 = vld [vmem:[%s1 + $0x8] sm:$0xf]
      %v186 = vld [vmem:[%s1 + $0xc] sm:$0xf]
      %v187 = vld [vmem:[%s1 + $0x10] sm:$0xf]
      %v188 = vld [vmem:[%s1 + $0x14] sm:$0xf]
      %v189 = vld [vmem:[%s1 + $0x18] sm:$0xf]
      %v190 = vld [vmem:[%s1 + $0x1c] sm:$0xf]
      %v191 = vld [vmem:[%s1 + $0x20] sm:$0xf]
      %v192 = vld [vmem:[%s2] sm:$0x1]
      %v194 = vperm.slane %v192, 0
      %v204 = vunpack.c.l.b16 %v175
      %v205 = vunpack.c.l.b16 %v176
      %v206 = vunpack.c.l.b16 %v177
      %v207 = vunpack.c.l.b16 %v178
      %v208 = vunpack.c.l.b16 %v179
      %v209 = vunpack.c.l.b16 %v180
      %v210 = vunpack.c.l.b16 %v181
      %v211 = vunpack.c.l.b16 %v182
      %v212 = vpack.c.b16 %v205, %v204
      %v213 = vpack.c.b16 %v207, %v206
      %v214 = vpack.c.b16 %v209, %v208
      %v215 = vpack.c.b16 %v211, %v210
      %v225 = vunpack.c.l.b16 %v183
      %v226 = vunpack.c.l.b16 %v184
      %v227 = vunpack.c.l.b16 %v185
      %v228 = vunpack.c.l.b16 %v186
      %v229 = vunpack.c.l.b16 %v187
      %v230 = vunpack.c.l.b16 %v188
      %v231 = vunpack.c.l.b16 %v189
      %v232 = vunpack.c.l.b16 %v190
      %v233 = vunpack.c.l.b16 %v191
      %v234 = vpack.c.b16 %v226, %v225
      %v235 = vpack.c.b16 %v228, %v227
      %v236 = vpack.c.b16 %v230, %v229
      %v237 = vpack.c.b16 %v232, %v231
      %v238 = vpack.c.b16 %v233, %v233
      %vm243 = vcmask 588800
      %v245 = vsel %vm243, %v212, 0
      %v248 = vsel %vm243, %v213, 0
      %v251 = vsel %vm243, %v214, 0
      %v254 = vsel %vm243, %v215, 0
      %vm256 = vcmask 1043456
      %v258 = vsel %vm256, %v238, 0
      %260 = vmatpush.bf16.msra.mxu0 0
      %261 = vmatpush.bf16.msra.mxu0 0
      %262 = vmatpush.bf16.msra.mxu0 0
      %263 = vmatpush.bf16.msra.mxu0 %v258
      %264 = vmatpush.bf16.msra.mxu0 %v237
      %265 = vmatpush.bf16.msra.mxu0 %v236
      %266 = vmatpush.bf16.msra.mxu0 %v235
      %267 = vmatpush.bf16.msra.mxu0 %v234
      %268 = vmatmul.bf16.gmra.mxu0 %v245
      %v269 = vpop.f32.mrf.mxu0
      %v270 = vadd.f32 %v194, %v269
      %v271 = vpop.f32.mrf.mxu0
      %v272 = vadd.f32 %v194, %v271
      %273 = vmatmul.bf16.gmra.mxu0 %v248
      %v274 = vpop.f32.mrf.mxu0
      %v275 = vadd.f32 %v194, %v274
      %v276 = vpop.f32.mrf.mxu0
      %v277 = vadd.f32 %v194, %v276
      %278 = vmatmul.bf16.gmra.mxu0 %v251
      %v279 = vpop.f32.mrf.mxu0
      %v280 = vadd.f32 %v194, %v279
      %v281 = vpop.f32.mrf.mxu0
      %v282 = vadd.f32 %v194, %v281
      %283 = vmatmul.bf16.gmra.mxu0 %v254
      %v284 = vpop.f32.mrf.mxu0
      %v285 = vadd.f32 %v194, %v284
      %v286 = vpop.f32.mrf.mxu0
      %v287 = vadd.f32 %v194, %v286
      %288 = vdwg.mxu0
      %v289 = vmax.f32 %v270, 0.0
      %v290 = vmax.f32 %v272, 0.0
      %v291 = vmax.f32 %v275, 0.0
      %v292 = vmax.f32 %v277, 0.0
      %v293 = vmax.f32 %v280, 0.0
      %v294 = vmax.f32 %v282, 0.0
      %v295 = vmax.f32 %v285, 0.0
      %v296 = vmax.f32 %v287, 0.0
      %v297 = vpack.c.bf16 %v289, %v289
      %v298 = vpack.c.bf16 %v290, %v290
      %v299 = vpack.c.bf16 %v291, %v291
      %v300 = vpack.c.bf16 %v292, %v292
      %v301 = vpack.c.bf16 %v293, %v293
      %v302 = vpack.c.bf16 %v294, %v294
      %v303 = vpack.c.bf16 %v295, %v295
      %v304 = vpack.c.bf16 %v296, %v296
      %305 = vst [vmem:[%s172] sm:$0xf] %v297
      %306 = vst [vmem:[%s172 + $0x4] sm:$0xf] %v298
      %307 = vst [vmem:[%s172 + $0x8] sm:$0xf] %v299
      %308 = vst [vmem:[%s172 + $0xc] sm:$0xf] %v300
      %309 = vst [vmem:[%s172 + $0x10] sm:$0xf] %v301
      %310 = vst [vmem:[%s172 + $0x14] sm:$0xf] %v302
      %311 = vst [vmem:[%s172 + $0x18] sm:$0xf] %v303
      %312 = vst [vmem:[%s172 + $0x1c] sm:$0xf] %v304
      %s313 = smul.u32 8, %s14
      %p314 = scmp.lt.s32.totalorder %s313, 15
      %s315 = scalar_select %p314, %s313, 15
      %s316 = smul.addr %s315, 4
      %s317 = scalar_lea.vmem %s3, %s316
      // Predicated region
      $region33: #{encoder_decoder_forward.13} parent=31 // pred_check
        %p318 = pneg %p100
      $region34: #{encoder_decoder_forward.13} parent=31 // pred_check_branch
        %320 = sbr.rel (%p318) target = $region36
      $region35: #{encoder_decoder_forward.13} parent=31 // pred_region
        %s321 = smul.u32 8, %s14
      $region36: #{encoder_decoder_forward.13} parent=31 // pred_fallthru
        _
    $region32: #{encoder_decoder_forward.13} parent=5 // pred_fallthru
      _
    %p322 = scmp.le.s32.totalorder 2, %s9
    // Predicated region
    $region37: #{encoder_decoder_forward.13} parent=5 // pred_check
      %p323 = pneg %p322
    $region38: #{encoder_decoder_forward.13} parent=5 // pred_check_branch
      %325 = sbr.rel (%p323) target = $region40
    $region39: #{encoder_decoder_forward.13} parent=5 // pred_region
      %s326 = ssub.s32 %s9, 2
      // Predicated region
      $region41: #{encoder_decoder_forward.13} parent=39 // pred_check
        %p327 = pneg %p106
      $region42: #{encoder_decoder_forward.13} parent=39 // pred_check_branch
        %329 = sbr.rel (%p327) target = $region44
      $region43: #{encoder_decoder_forward.13} parent=39 // pred_region
        %s330 = smul.u32 8, %s15
        %p331 = scmp.lt.s32.totalorder %s330, 15
        %s332 = scalar_select %p331, %s330, 15
        %s333 = smul.addr %s332, 4
        %s334 = scalar_lea.vmem %s3, %s333
      $region44: #{encoder_decoder_forward.13} parent=39 // pred_fallthru
        _
    $region40: #{encoder_decoder_forward.13} parent=5 // pred_fallthru
      _
  $region6: #{encoder_decoder_forward.13} parent=0 // loop_footer
    %s13 = sadd.s32 1, %s9
  $region7: #{encoder_decoder_forward.13} parent=0 // loop_footer_branch
    %8 = sbr.rel target = $region3
  $region8: #{encoder_decoder_forward.13} parent=0 // loop_exit
    _

// kernel: encoder_decoder_forward.14
$region0: #{encoder_decoder_forward.14}
  #allocation0 [shape = 'u32[]', space=smem, size = 0x4, offset = 0x4, fixed_abs, tag = 'smem constant byte address 0x4 - core index']
  #allocation1 [shape = 'u32[72,128]{1,0:T(1,128)}', space=vmem, size = 0x9000, scoped, tag = 'internal scratch']
  %s0 = inlined_call_operand.vmem [shape: bf16[128,8], index: 0, kind: input, shape index: {}]
  %s1 = inlined_call_operand.vmem [shape: bf16[8,128], index: 1, kind: input, shape index: {}]
  %s2 = inlined_call_operand.vmem [shape: f32[1,128], index: 2, kind: input, shape index: {}]
  %s3 = inlined_call_operand.vmem [shape: bf16[128,128], index: 3, kind: output, shape index: {}]
  %s4 = sld [smem:[#allocation0]]
  $region45: #{encoder_decoder_forward.14} parent=0
    _
  %s6 = ssub.s32 1, %s4
  %s7 = scalar_select 0, %s6, %s4
  loop: start=0, step=1, limit=4
  $region2: #{encoder_decoder_forward.14} parent=0 // loop_pre_header
    _
  $region3: #{encoder_decoder_forward.14} parent=0 // loop_header
    %s9 = sphi 0, %s13
    %p10 = scmp.ge.s32.totalorder %s9, 4
    %s19 = sphi 0, %s21
    %s22 = sphi 0, %s19
    %s23 = sphi 0, %s22
    %s39 = sphi 0, %s23
    %s43 = sphi 0, %s43
    %s45 = sphi 0, %s43
    %s46 = sphi 0, %s45
    %s60 = sphi 0, %s46
    %s64 = sphi 0, %s64
    %s66 = sphi 0, %s64
    %s67 = sphi 0, %s66
    %s81 = sphi 0, %s67
    %s87 = sphi 0, %s89
    %s90 = sphi 0, %s87
    %s91 = sphi 0, %s90
    %s107 = sphi 0, %s91
  $region4: #{encoder_decoder_forward.14} parent=0 // loop_header_branch
    %12 = sbr.rel (%p10) target = $region8
  $region5: #{encoder_decoder_forward.14} parent=0 // loop_body
    %s14 = ssub.s32 %s9, 1
    %s15 = ssub.s32 %s9, 2
    %s16 = sadd.s32 %s9, 1
    %s17 = ssub.s32 %s9, %s16
    %p18 = scmp.eq.s32.totalorder %s17, 0
    %s20 = sadd.s32 %s19, 1
    %s21 = scalar_select %p18, %s19, %s20
    %p24 = pneg %p18
    %p25 = scmp.eq.s32.totalorder %s9, 1
    %p26 = por %p24, %p25
    %p27 = scmp.ne.s32.totalorder %s19, %s22
    %p28 = scmp.eq.s32.totalorder %s9, 0
    %p29 = por %p27, %p28
    %p30 = scmp.ne.s32.totalorder %s19, %s22
    %p31 = scmp.eq.s32.totalorder %s14, 1
    %p32 = por %p30, %p31
    %p33 = scmp.ne.s32.totalorder %s22, %s23
    %p34 = scmp.eq.s32.totalorder %s14, 0
    %p35 = por %p33, %p34
    %p36 = scmp.ne.s32.totalorder %s22, %s23
    %p37 = scmp.eq.s32.totalorder %s15, 1
    %p38 = por %p36, %p37
    %p40 = scmp.ne.s32.totalorder %s23, %s39
    %p41 = scmp.eq.s32.totalorder %s15, 0
    %p42 = por %p40, %p41
    %s44 = sadd.s32 %s43, 1
    %p47 = scmp.eq.s32.totalorder %s9, 1
    %p48 = scmp.ne.s32.totalorder %s43, %s45
    %p49 = scmp.eq.s32.totalorder %s9, 0
    %p50 = por %p48, %p49
    %p51 = scmp.ne.s32.totalorder %s43, %s45
    %p52 = scmp.eq.s32.totalorder %s14, 1
    %p53 = por %p51, %p52
    %p54 = scmp.ne.s32.totalorder %s45, %s46
    %p55 = scmp.eq.s32.totalorder %s14, 0
    %p56 = por %p54, %p55
    %p57 = scmp.ne.s32.totalorder %s45, %s46
    %p58 = scmp.eq.s32.totalorder %s15, 1
    %p59 = por %p57, %p58
    %p61 = scmp.ne.s32.totalorder %s46, %s60
    %p62 = scmp.eq.s32.totalorder %s15, 0
    %p63 = por %p61, %p62
    %s65 = sadd.s32 %s64, 1
    %p68 = scmp.eq.s32.totalorder %s9, 1
    %p69 = scmp.ne.s32.totalorder %s64, %s66
    %p70 = scmp.eq.s32.totalorder %s9, 0
    %p71 = por %p69, %p70
    %p72 = scmp.ne.s32.totalorder %s64, %s66
    %p73 = scmp.eq.s32.totalorder %s14, 1
    %p74 = por %p72, %p73
    %p75 = scmp.ne.s32.totalorder %s66, %s67
    %p76 = scmp.eq.s32.totalorder %s14, 0
    %p77 = por %p75, %p76
    %p78 = scmp.ne.s32.totalorder %s66, %s67
    %p79 = scmp.eq.s32.totalorder %s15, 1
    %p80 = por %p78, %p79
    %p82 = scmp.ne.s32.totalorder %s67, %s81
    %p83 = scmp.eq.s32.totalorder %s15, 0
    %p84 = por %p82, %p83
    %s85 = ssub.s32 %s9, %s16
    %p86 = scmp.eq.s32.totalorder %s85, 0
    %s88 = sadd.s32 %s87, 1
    %s89 = scalar_select %p86, %s87, %s88
    %p92 = pneg %p86
    %p93 = scmp.eq.s32.totalorder %s9, 1
    %p94 = por %p92, %p93
    %p95 = scmp.ne.s32.totalorder %s87, %s90
    %p96 = scmp.eq.s32.totalorder %s9, 0
    %p97 = por %p95, %p96
    %p98 = scmp.ne.s32.totalorder %s87, %s90
    %p99 = scmp.eq.s32.totalorder %s14, 1
    %p100 = por %p98, %p99
    %p101 = scmp.ne.s32.totalorder %s90, %s91
    %p102 = scmp.eq.s32.totalorder %s14, 0
    %p103 = por %p101, %p102
    %p104 = scmp.ne.s32.totalorder %s90, %s91
    %p105 = scmp.eq.s32.totalorder %s15, 1
    %p106 = por %p104, %p105
    %p108 = scmp.ne.s32.totalorder %s91, %s107
    %p109 = scmp.eq.s32.totalorder %s15, 0
    %p110 = por %p108, %p109
    %p111 = scmp.le.s32.totalorder 1, %s9
    %p112 = scmp.lt.s32.totalorder %s9, 3
    %p113 = pnand %p111, %p112
    %p114 = pneg %p113
    // Predicated region
    $region9: #{encoder_decoder_forward.14} parent=5 // pred_check
      _
    $region10: #{encoder_decoder_forward.14} parent=5 // pred_check_branch
      %116 = sbr.rel (%p113) target = $region12
    $region11: #{encoder_decoder_forward.14} parent=5 // pred_region
      %s117 = ssub.s32 %s9, 1
      // Predicated region
      $region13: #{encoder_decoder_forward.14} parent=11 // pred_check
        %p118 = pneg %p56
      $region14: #{encoder_decoder_forward.14} parent=11 // pred_check_branch
        %120 = sbr.rel (%p118) target = $region16
      $region15: #{encoder_decoder_forward.14} parent=11 // pred_region
        _
      $region16: #{encoder_decoder_forward.14} parent=11 // pred_fallthru
        _
      // Predicated region
      $region17: #{encoder_decoder_forward.14} parent=11 // pred_check
        %p121 = pneg %p77
      $region18: #{encoder_decoder_forward.14} parent=11 // pred_check_branch
        %123 = sbr.rel (%p121) target = $region20
      $region19: #{encoder_decoder_forward.14} parent=11 // pred_region
        _
      $region20: #{encoder_decoder_forward.14} parent=11 // pred_fallthru
        _
    $region12: #{encoder_decoder_forward.14} parent=5 // pred_fallthru
      _
    %p124 = scmp.lt.s32.totalorder %s9, 2
    // Predicated region
    $region21: #{encoder_decoder_forward.14} parent=5 // pred_check
      %p125 = pneg %p124
    $region22: #{encoder_decoder_forward.14} parent=5 // pred_check_branch
      %127 = sbr.rel (%p125) target = $region24
    $region23: #{encoder_decoder_forward.14} parent=5 // pred_region
      // Predicated region
      $region25: #{encoder_decoder_forward.14} parent=23 // pred_check
        %p128 = pneg %p29
      $region26: #{encoder_decoder_forward.14} parent=23 // pred_check_branch
        %130 = sbr.rel (%p128) target = $region28
      $region27: #{encoder_decoder_forward.14} parent=23 // pred_region
        %s131 = smul.u32 8, %s9
        %p132 = scmp.lt.s32.totalorder %s131, 15
        %s133 = scalar_select %p132, %s131, 15
        %s134 = smul.addr %s133, 4
        %s135 = scalar_lea.vmem %s0, %s134
        %s136 = smul.u32 8, %s9
      $region28: #{encoder_decoder_forward.14} parent=23 // pred_fallthru
        _
    $region24: #{encoder_decoder_forward.14} parent=5 // pred_fallthru
      _
    %p137 = scmp.le.s32.totalorder 1, %s9
    %p138 = scmp.lt.s32.totalorder %s9, 3
    %p139 = pnand %p137, %p138
    %p140 = pneg %p139
    // Predicated region
    $region29: #{encoder_decoder_forward.14} parent=5 // pred_check
      _
    $region30: #{encoder_decoder_forward.14} parent=5 // pred_check_branch
      %142 = sbr.rel (%p139) target = $region32
    $region31: #{encoder_decoder_forward.14} parent=5 // pred_region
      %s143 = ssub.s32 %s9, 1
      %s144 = smul.u32 8, %s14
      %p145 = scmp.lt.s32.totalorder %s144, 15
      %s146 = scalar_select %p145, %s144, 15
      %s147 = smul.addr %s146, 4
      %s148 = scalar_lea.vmem %s0, %s147
      %p149 = pneg %p35
      %p150 = pneg %p32
      %p151 = pneg %p56
      %p152 = pneg %p53
      %p153 = pneg %p77
      %p154 = pneg %p74
      %p155 = pneg %p103
      %p156 = pneg %p100
      %s157 = smul.u32 8, %s14
      %p158 = scmp.lt.s32.totalorder %s157, 15
      %s159 = scalar_select %p158, %s157, 15
      %s160 = smul.addr %s159, 4
      %s161 = scalar_lea.vmem %s3, %s160
      %s162 = smul.u32 8, %s14
      %p163 = scmp.lt.s32.totalorder %s162, 15
      %s164 = scalar_select %p163, %s162, 15
      %s165 = smul.addr %s164, 4
      %s166 = scalar_lea.vmem %s0, %s165
      %s167 = smul.u32 8, %s14
      %s168 = smul.u32 8, %s14
      %p169 = scmp.lt.s32.totalorder %s168, 15
      %s170 = scalar_select %p169, %s168, 15
      %s171 = smul.addr %s170, 4
      %s172 = scalar_lea.vmem %s3, %s171
      %s173 = smul.u32 8, %s14
      %v175 = vld [vmem:[%s166] sm:$0xf]
      %v176 = vld [vmem:[%s166 + $0x4] sm:$0xf]
      %v177 = vld [vmem:[%s166 + $0x8] sm:$0xf]
      %v178 = vld [vmem:[%s166 + $0xc] sm:$0xf]
      %v179 = vld [vmem:[%s166 + $0x10] sm:$0xf]
      %v180 = vld [vmem:[%s166 + $0x14] sm:$0xf]
      %v181 = vld [vmem:[%s166 + $0x18] sm:$0xf]
      %v182 = vld [vmem:[%s166 + $0x1c] sm:$0xf]
      %v183 = vld [vmem:[%s1] sm:$0xf]
      %v184 = vld [vmem:[%s2] sm:$0x1]
      %v186 = vperm.slane %v184, 0
      %v196 = vunpack.c.l.b16 %v175
      %v197 = vunpack.c.l.b16 %v176
      %v198 = vunpack.c.l.b16 %v177
      %v199 = vunpack.c.l.b16 %v178
      %v200 = vunpack.c.l.b16 %v179
      %v201 = vunpack.c.l.b16 %v180
      %v202 = vunpack.c.l.b16 %v181
      %v203 = vunpack.c.l.b16 %v182
      %v204 = vpack.c.b16 %v197, %v196
      %v205 = vpack.c.b16 %v199, %v198
      %v206 = vpack.c.b16 %v201, %v200
      %v207 = vpack.c.b16 %v203, %v202
      %vm208 = vcmask 64512
      %v210 = vsel %vm208, %v204, 0
      %v213 = vsel %vm208, %v205, 0
      %v216 = vsel %vm208, %v206, 0
      %v219 = vsel %vm208, %v207, 0
      %vm221 = vcmask 1043456
      %v223 = vsel %vm221, %v183, 0
      %225 = vmatpush.bf16.msra.mxu0 0
      %226 = vmatpush.bf16.msra.mxu0 0
      %227 = vmatpush.bf16.msra.mxu0 0
      %228 = vmatpush.bf16.msra.mxu0 0
      %229 = vmatpush.bf16.msra.mxu0 0
      %230 = vmatpush.bf16.msra.mxu0 0
      %231 = vmatpush.bf16.msra.mxu0 0
      %232 = vmatpush.bf16.msra.mxu0 %v223
      %233 = vmatmul.bf16.gmra.mxu0 %v210
      %v234 = vpop.f32.mrf.mxu0
      %v235 = vadd.f32 %v186, %v234
      %v236 = vpop.f32.mrf.mxu0
      %v237 = vadd.f32 %v186, %v236
      %238 = vmatmul.bf16.gmra.mxu0 %v213
      %v239 = vpop.f32.mrf.mxu0
      %v240 = vadd.f32 %v186, %v239
      %v241 = vpop.f32.mrf.mxu0
      %v242 = vadd.f32 %v186, %v241
      %243 = vmatmul.bf16.gmra.mxu0 %v216
      %v244 = vpop.f32.mrf.mxu0
      %v245 = vadd.f32 %v186, %v244
      %v246 = vpop.f32.mrf.mxu0
      %v247 = vadd.f32 %v186, %v246
      %248 = vmatmul.bf16.gmra.mxu0 %v219
      %v249 = vpop.f32.mrf.mxu0
      %v250 = vadd.f32 %v186, %v249
      %v251 = vpop.f32.mrf.mxu0
      %v252 = vadd.f32 %v186, %v251
      %253 = vdwg.mxu0
      %v254 = vmax.f32 %v235, 0.0
      %v255 = vmax.f32 %v237, 0.0
      %v256 = vmax.f32 %v240, 0.0
      %v257 = vmax.f32 %v242, 0.0
      %v258 = vmax.f32 %v245, 0.0
      %v259 = vmax.f32 %v247, 0.0
      %v260 = vmax.f32 %v250, 0.0
      %v261 = vmax.f32 %v252, 0.0
      %v262 = vpack.c.bf16 %v254, %v254
      %v263 = vpack.c.bf16 %v255, %v255
      %v264 = vpack.c.bf16 %v256, %v256
      %v265 = vpack.c.bf16 %v257, %v257
      %v266 = vpack.c.bf16 %v258, %v258
      %v267 = vpack.c.bf16 %v259, %v259
      %v268 = vpack.c.bf16 %v260, %v260
      %v269 = vpack.c.bf16 %v261, %v261
      %270 = vst [vmem:[%s172] sm:$0xf] %v262
      %271 = vst [vmem:[%s172 + $0x4] sm:$0xf] %v263
      %272 = vst [vmem:[%s172 + $0x8] sm:$0xf] %v264
      %273 = vst [vmem:[%s172 + $0xc] sm:$0xf] %v265
      %274 = vst [vmem:[%s172 + $0x10] sm:$0xf] %v266
      %275 = vst [vmem:[%s172 + $0x14] sm:$0xf] %v267
      %276 = vst [vmem:[%s172 + $0x18] sm:$0xf] %v268
      %277 = vst [vmem:[%s172 + $0x1c] sm:$0xf] %v269
      %s278 = smul.u32 8, %s14
      %p279 = scmp.lt.s32.totalorder %s278, 15
      %s280 = scalar_select %p279, %s278, 15
      %s281 = smul.addr %s280, 4
      %s282 = scalar_lea.vmem %s3, %s281
      // Predicated region
      $region33: #{encoder_decoder_forward.14} parent=31 // pred_check
        %p283 = pneg %p100
      $region34: #{encoder_decoder_forward.14} parent=31 // pred_check_branch
        %285 = sbr.rel (%p283) target = $region36
      $region35: #{encoder_decoder_forward.14} parent=31 // pred_region
        %s286 = smul.u32 8, %s14
      $region36: #{encoder_decoder_forward.14} parent=31 // pred_fallthru
        _
    $region32: #{encoder_decoder_forward.14} parent=5 // pred_fallthru
      _
    %p287 = scmp.le.s32.totalorder 2, %s9
    // Predicated region
    $region37: #{encoder_decoder_forward.14} parent=5 // pred_check
      %p288 = pneg %p287
    $region38: #{encoder_decoder_forward.14} parent=5 // pred_check_branch
      %290 = sbr.rel (%p288) target = $region40
    $region39: #{encoder_decoder_forward.14} parent=5 // pred_region
      %s291 = ssub.s32 %s9, 2
      // Predicated region
      $region41: #{encoder_decoder_forward.14} parent=39 // pred_check
        %p292 = pneg %p106
      $region42: #{encoder_decoder_forward.14} parent=39 // pred_check_branch
        %294 = sbr.rel (%p292) target = $region44
      $region43: #{encoder_decoder_forward.14} parent=39 // pred_region
        %s295 = smul.u32 8, %s15
        %p296 = scmp.lt.s32.totalorder %s295, 15
        %s297 = scalar_select %p296, %s295, 15
        %s298 = smul.addr %s297, 4
        %s299 = scalar_lea.vmem %s3, %s298
      $region44: #{encoder_decoder_forward.14} parent=39 // pred_fallthru
        _
    $region40: #{encoder_decoder_forward.14} parent=5 // pred_fallthru
      _
  $region6: #{encoder_decoder_forward.14} parent=0 // loop_footer
    %s13 = sadd.s32 1, %s9
  $region7: #{encoder_decoder_forward.14} parent=0 // loop_footer_branch
    %8 = sbr.rel target = $region3
  $region8: #{encoder_decoder_forward.14} parent=0 // loop_exit
    _

// kernel: encoder_decoder_forward.15
$region0: #{encoder_decoder_forward.15}
  #allocation0 [shape = 'u32[]', space=smem, size = 0x4, offset = 0x4, fixed_abs, tag = 'smem constant byte address 0x4 - core index']
  #allocation1 [shape = 'u32[72,128]{1,0:T(1,128)}', space=vmem, size = 0x9000, scoped, tag = 'internal scratch']
  %s0 = inlined_call_operand.vmem [shape: bf16[512,36], index: 0, kind: input, shape index: {}]
  %s1 = inlined_call_operand.vmem [shape: bf16[36,128], index: 1, kind: input, shape index: {}]
  %s2 = inlined_call_operand.vmem [shape: f32[1,128], index: 2, kind: input, shape index: {}]
  %s3 = inlined_call_operand.vmem [shape: bf16[512,128], index: 3, kind: output, shape index: {}]
  %s4 = sld [smem:[#allocation0]]
  $region45: #{encoder_decoder_forward.15} parent=0
    _
  %s6 = ssub.s32 1, %s4
  %s7 = scalar_select 0, %s6, %s4
  loop: start=0, step=1, limit=4
  $region2: #{encoder_decoder_forward.15} parent=0 // loop_pre_header
    _
  $region3: #{encoder_decoder_forward.15} parent=0 // loop_header
    %s9 = sphi 0, %s13
    %p10 = scmp.ge.s32.totalorder %s9, 4
    %s19 = sphi 0, %s21
    %s22 = sphi 0, %s19
    %s23 = sphi 0, %s22
    %s39 = sphi 0, %s23
    %s43 = sphi 0, %s43
    %s45 = sphi 0, %s43
    %s46 = sphi 0, %s45
    %s60 = sphi 0, %s46
    %s64 = sphi 0, %s64
    %s66 = sphi 0, %s64
    %s67 = sphi 0, %s66
    %s81 = sphi 0, %s67
    %s87 = sphi 0, %s89
    %s90 = sphi 0, %s87
    %s91 = sphi 0, %s90
    %s107 = sphi 0, %s91
  $region4: #{encoder_decoder_forward.15} parent=0 // loop_header_branch
    %12 = sbr.rel (%p10) target = $region8
  $region5: #{encoder_decoder_forward.15} parent=0 // loop_body
    %s14 = ssub.s32 %s9, 1
    %s15 = ssub.s32 %s9, 2
    %s16 = sadd.s32 %s9, 1
    %s17 = ssub.s32 %s9, %s16
    %p18 = scmp.eq.s32.totalorder %s17, 0
    %s20 = sadd.s32 %s19, 1
    %s21 = scalar_select %p18, %s19, %s20
    %p24 = pneg %p18
    %p25 = scmp.eq.s32.totalorder %s9, 1
    %p26 = por %p24, %p25
    %p27 = scmp.ne.s32.totalorder %s19, %s22
    %p28 = scmp.eq.s32.totalorder %s9, 0
    %p29 = por %p27, %p28
    %p30 = scmp.ne.s32.totalorder %s19, %s22
    %p31 = scmp.eq.s32.totalorder %s14, 1
    %p32 = por %p30, %p31
    %p33 = scmp.ne.s32.totalorder %s22, %s23
    %p34 = scmp.eq.s32.totalorder %s14, 0
    %p35 = por %p33, %p34
    %p36 = scmp.ne.s32.totalorder %s22, %s23
    %p37 = scmp.eq.s32.totalorder %s15, 1
    %p38 = por %p36, %p37
    %p40 = scmp.ne.s32.totalorder %s23, %s39
    %p41 = scmp.eq.s32.totalorder %s15, 0
    %p42 = por %p40, %p41
    %s44 = sadd.s32 %s43, 1
    %p47 = scmp.eq.s32.totalorder %s9, 1
    %p48 = scmp.ne.s32.totalorder %s43, %s45
    %p49 = scmp.eq.s32.totalorder %s9, 0
    %p50 = por %p48, %p49
    %p51 = scmp.ne.s32.totalorder %s43, %s45
    %p52 = scmp.eq.s32.totalorder %s14, 1
    %p53 = por %p51, %p52
    %p54 = scmp.ne.s32.totalorder %s45, %s46
    %p55 = scmp.eq.s32.totalorder %s14, 0
    %p56 = por %p54, %p55
    %p57 = scmp.ne.s32.totalorder %s45, %s46
    %p58 = scmp.eq.s32.totalorder %s15, 1
    %p59 = por %p57, %p58
    %p61 = scmp.ne.s32.totalorder %s46, %s60
    %p62 = scmp.eq.s32.totalorder %s15, 0
    %p63 = por %p61, %p62
    %s65 = sadd.s32 %s64, 1
    %p68 = scmp.eq.s32.totalorder %s9, 1
    %p69 = scmp.ne.s32.totalorder %s64, %s66
    %p70 = scmp.eq.s32.totalorder %s9, 0
    %p71 = por %p69, %p70
    %p72 = scmp.ne.s32.totalorder %s64, %s66
    %p73 = scmp.eq.s32.totalorder %s14, 1
    %p74 = por %p72, %p73
    %p75 = scmp.ne.s32.totalorder %s66, %s67
    %p76 = scmp.eq.s32.totalorder %s14, 0
    %p77 = por %p75, %p76
    %p78 = scmp.ne.s32.totalorder %s66, %s67
    %p79 = scmp.eq.s32.totalorder %s15, 1
    %p80 = por %p78, %p79
    %p82 = scmp.ne.s32.totalorder %s67, %s81
    %p83 = scmp.eq.s32.totalorder %s15, 0
    %p84 = por %p82, %p83
    %s85 = ssub.s32 %s9, %s16
    %p86 = scmp.eq.s32.totalorder %s85, 0
    %s88 = sadd.s32 %s87, 1
    %s89 = scalar_select %p86, %s87, %s88
    %p92 = pneg %p86
    %p93 = scmp.eq.s32.totalorder %s9, 1
    %p94 = por %p92, %p93
    %p95 = scmp.ne.s32.totalorder %s87, %s90
    %p96 = scmp.eq.s32.totalorder %s9, 0
    %p97 = por %p95, %p96
    %p98 = scmp.ne.s32.totalorder %s87, %s90
    %p99 = scmp.eq.s32.totalorder %s14, 1
    %p100 = por %p98, %p99
    %p101 = scmp.ne.s32.totalorder %s90, %s91
    %p102 = scmp.eq.s32.totalorder %s14, 0
    %p103 = por %p101, %p102
    %p104 = scmp.ne.s32.totalorder %s90, %s91
    %p105 = scmp.eq.s32.totalorder %s15, 1
    %p106 = por %p104, %p105
    %p108 = scmp.ne.s32.totalorder %s91, %s107
    %p109 = scmp.eq.s32.totalorder %s15, 0
    %p110 = por %p108, %p109
    %p111 = scmp.le.s32.totalorder 1, %s9
    %p112 = scmp.lt.s32.totalorder %s9, 3
    %p113 = pnand %p111, %p112
    %p114 = pneg %p113
    // Predicated region
    $region9: #{encoder_decoder_forward.15} parent=5 // pred_check
      _
    $region10: #{encoder_decoder_forward.15} parent=5 // pred_check_branch
      %116 = sbr.rel (%p113) target = $region12
    $region11: #{encoder_decoder_forward.15} parent=5 // pred_region
      %s117 = ssub.s32 %s9, 1
      // Predicated region
      $region13: #{encoder_decoder_forward.15} parent=11 // pred_check
        %p118 = pneg %p56
      $region14: #{encoder_decoder_forward.15} parent=11 // pred_check_branch
        %120 = sbr.rel (%p118) target = $region16
      $region15: #{encoder_decoder_forward.15} parent=11 // pred_region
        _
      $region16: #{encoder_decoder_forward.15} parent=11 // pred_fallthru
        _
      // Predicated region
      $region17: #{encoder_decoder_forward.15} parent=11 // pred_check
        %p121 = pneg %p77
      $region18: #{encoder_decoder_forward.15} parent=11 // pred_check_branch
        %123 = sbr.rel (%p121) target = $region20
      $region19: #{encoder_decoder_forward.15} parent=11 // pred_region
        _
      $region20: #{encoder_decoder_forward.15} parent=11 // pred_fallthru
        _
    $region12: #{encoder_decoder_forward.15} parent=5 // pred_fallthru
      _
    %p124 = scmp.lt.s32.totalorder %s9, 2
    // Predicated region
    $region21: #{encoder_decoder_forward.15} parent=5 // pred_check
      %p125 = pneg %p124
    $region22: #{encoder_decoder_forward.15} parent=5 // pred_check_branch
      %127 = sbr.rel (%p125) target = $region24
    $region23: #{encoder_decoder_forward.15} parent=5 // pred_region
      // Predicated region
      $region25: #{encoder_decoder_forward.15} parent=23 // pred_check
        %p128 = pneg %p29
      $region26: #{encoder_decoder_forward.15} parent=23 // pred_check_branch
        %130 = sbr.rel (%p128) target = $region28
      $region27: #{encoder_decoder_forward.15} parent=23 // pred_region
        %s131 = smul.u32 32, %s9
        %p132 = scmp.lt.s32.totalorder %s131, 63
        %s133 = scalar_select %p132, %s131, 63
        %s134 = smul.addr %s133, 4
        %s135 = scalar_lea.vmem %s0, %s134
        %s136 = smul.u32 32, %s9
      $region28: #{encoder_decoder_forward.15} parent=23 // pred_fallthru
        _
    $region24: #{encoder_decoder_forward.15} parent=5 // pred_fallthru
      _
    %p137 = scmp.le.s32.totalorder 1, %s9
    %p138 = scmp.lt.s32.totalorder %s9, 3
    %p139 = pnand %p137, %p138
    %p140 = pneg %p139
    // Predicated region
    $region29: #{encoder_decoder_forward.15} parent=5 // pred_check
      _
    $region30: #{encoder_decoder_forward.15} parent=5 // pred_check_branch
      %142 = sbr.rel (%p139) target = $region32
    $region31: #{encoder_decoder_forward.15} parent=5 // pred_region
      %s143 = ssub.s32 %s9, 1
      %s144 = smul.u32 32, %s14
      %p145 = scmp.lt.s32.totalorder %s144, 63
      %s146 = scalar_select %p145, %s144, 63
      %s147 = smul.addr %s146, 4
      %s148 = scalar_lea.vmem %s0, %s147
      %p149 = pneg %p35
      %p150 = pneg %p32
      %p151 = pneg %p56
      %p152 = pneg %p53
      %p153 = pneg %p77
      %p154 = pneg %p74
      %p155 = pneg %p103
      %p156 = pneg %p100
      %s157 = smul.u32 32, %s14
      %p158 = scmp.lt.s32.totalorder %s157, 63
      %s159 = scalar_select %p158, %s157, 63
      %s160 = smul.addr %s159, 4
      %s161 = scalar_lea.vmem %s3, %s160
      %s162 = smul.u32 32, %s14
      %p163 = scmp.lt.s32.totalorder %s162, 63
      %s164 = scalar_select %p163, %s162, 63
      %s165 = smul.addr %s164, 4
      %s166 = scalar_lea.vmem %s0, %s165
      %s167 = smul.u32 32, %s14
      %s168 = smul.u32 32, %s14
      %p169 = scmp.lt.s32.totalorder %s168, 63
      %s170 = scalar_select %p169, %s168, 63
      %s171 = smul.addr %s170, 4
      %s172 = scalar_lea.vmem %s3, %s171
      %s173 = smul.u32 32, %s14
      %v175 = vld [vmem:[%s166] sm:$0xf]
      %v176 = vld [vmem:[%s166 + $0x4] sm:$0xf]
      %v177 = vld [vmem:[%s166 + $0x8] sm:$0xf]
      %v178 = vld [vmem:[%s166 + $0xc] sm:$0xf]
      %v179 = vld [vmem:[%s166 + $0x10] sm:$0xf]
      %v180 = vld [vmem:[%s166 + $0x14] sm:$0xf]
      %v181 = vld [vmem:[%s166 + $0x18] sm:$0xf]
      %v182 = vld [vmem:[%s166 + $0x1c] sm:$0xf]
      %v183 = vld [vmem:[%s166 + $0x20] sm:$0xf]
      %v184 = vld [vmem:[%s166 + $0x24] sm:$0xf]
      %v185 = vld [vmem:[%s166 + $0x28] sm:$0xf]
      %v186 = vld [vmem:[%s166 + $0x2c] sm:$0xf]
      %v187 = vld [vmem:[%s166 + $0x30] sm:$0xf]
      %v188 = vld [vmem:[%s166 + $0x34] sm:$0xf]
      %v189 = vld [vmem:[%s166 + $0x38] sm:$0xf]
      %v190 = vld [vmem:[%s166 + $0x3c] sm:$0xf]
      %v191 = vld [vmem:[%s166 + $0x40] sm:$0xf]
      %v192 = vld [vmem:[%s166 + $0x44] sm:$0xf]
      %v193 = vld [vmem:[%s166 + $0x48] sm:$0xf]
      %v194 = vld [vmem:[%s166 + $0x4c] sm:$0xf]
      %v195 = vld [vmem:[%s166 + $0x50] sm:$0xf]
      %v196 = vld [vmem:[%s166 + $0x54] sm:$0xf]
      %v197 = vld [vmem:[%s166 + $0x58] sm:$0xf]
      %v198 = vld [vmem:[%s166 + $0x5c] sm:$0xf]
      %v199 = vld [vmem:[%s166 + $0x60] sm:$0xf]
      %v200 = vld [vmem:[%s166 + $0x64] sm:$0xf]
      %v201 = vld [vmem:[%s166 + $0x68] sm:$0xf]
      %v202 = vld [vmem:[%s166 + $0x6c] sm:$0xf]
      %v203 = vld [vmem:[%s166 + $0x70] sm:$0xf]
      %v204 = vld [vmem:[%s166 + $0x74] sm:$0xf]
      %v205 = vld [vmem:[%s166 + $0x78] sm:$0xf]
      %v206 = vld [vmem:[%s166 + $0x7c] sm:$0xf]
      %v207 = vld [vmem:[%s1] sm:$0xf]
      %v208 = vld [vmem:[%s1 + $0x4] sm:$0xf]
      %v209 = vld [vmem:[%s1 + $0x8] sm:$0xf]
      %v210 = vld [vmem:[%s1 + $0xc] sm:$0xf]
      %v211 = vld [vmem:[%s1 + $0x10] sm:$0x3]
      %v212 = vld [vmem:[%s2] sm:$0x1]
      %v214 = vperm.slane %v212, 0
      %v248 = vunpack.c.l.b16 %v175
      %v249 = vunpack.c.l.b16 %v176
      %v250 = vunpack.c.l.b16 %v177
      %v251 = vunpack.c.l.b16 %v178
      %v252 = vunpack.c.l.b16 %v179
      %v253 = vunpack.c.l.b16 %v180
      %v254 = vunpack.c.l.b16 %v181
      %v255 = vunpack.c.l.b16 %v182
      %v256 = vunpack.c.l.b16 %v183
      %v257 = vunpack.c.l.b16 %v184
      %v258 = vunpack.c.l.b16 %v185
      %v259 = vunpack.c.l.b16 %v186
      %v260 = vunpack.c.l.b16 %v187
      %v261 = vunpack.c.l.b16 %v188
      %v262 = vunpack.c.l.b16 %v189
      %v263 = vunpack.c.l.b16 %v190
      %v264 = vunpack.c.l.b16 %v191
      %v265 = vunpack.c.l.b16 %v192
      %v266 = vunpack.c.l.b16 %v193
      %v267 = vunpack.c.l.b16 %v194
      %v268 = vunpack.c.l.b16 %v195
      %v269 = vunpack.c.l.b16 %v196
      %v270 = vunpack.c.l.b16 %v197
      %v271 = vunpack.c.l.b16 %v198
      %v272 = vunpack.c.l.b16 %v199
      %v273 = vunpack.c.l.b16 %v200
      %v274 = vunpack.c.l.b16 %v201
      %v275 = vunpack.c.l.b16 %v202
      %v276 = vunpack.c.l.b16 %v203
      %v277 = vunpack.c.l.b16 %v204
      %v278 = vunpack.c.l.b16 %v205
      %v279 = vunpack.c.l.b16 %v206
      %v280 = vpack.c.b16 %v249, %v248
      %v281 = vpack.c.b16 %v251, %v250
      %v282 = vpack.c.b16 %v253, %v252
      %v283 = vpack.c.b16 %v255, %v254
      %v284 = vpack.c.b16 %v257, %v256
      %v285 = vpack.c.b16 %v259, %v258
      %v286 = vpack.c.b16 %v261, %v260
      %v287 = vpack.c.b16 %v263, %v262
      %v288 = vpack.c.b16 %v265, %v264
      %v289 = vpack.c.b16 %v267, %v266
      %v290 = vpack.c.b16 %v269, %v268
      %v291 = vpack.c.b16 %v271, %v270
      %v292 = vpack.c.b16 %v273, %v272
      %v293 = vpack.c.b16 %v275, %v274
      %v294 = vpack.c.b16 %v277, %v276
      %v295 = vpack.c.b16 %v279, %v278
      %v301 = vunpack.c.l.b16 %v207
      %v302 = vunpack.c.l.b16 %v208
      %v303 = vunpack.c.l.b16 %v209
      %v304 = vunpack.c.l.b16 %v210
      %v305 = vunpack.c.l.b16 %v211
      %v306 = vpack.c.b16 %v302, %v301
      %v307 = vpack.c.b16 %v304, %v303
      %v308 = vpack.c.b16 %v305, %v305
      %vm311 = vcmask 293888
      %v313 = vsel %vm311, %v280, 0
      %v316 = vsel %vm311, %v281, 0
      %v319 = vsel %vm311, %v282, 0
      %v322 = vsel %vm311, %v283, 0
      %v325 = vsel %vm311, %v284, 0
      %v328 = vsel %vm311, %v285, 0
      %v331 = vsel %vm311, %v286, 0
      %v334 = vsel %vm311, %v287, 0
      %v337 = vsel %vm311, %v288, 0
      %v340 = vsel %vm311, %v289, 0
      %v343 = vsel %vm311, %v290, 0
      %v346 = vsel %vm311, %v291, 0
      %v349 = vsel %vm311, %v292, 0
      %v352 = vsel %vm311, %v293, 0
      %v355 = vsel %vm311, %v294, 0
      %v358 = vsel %vm311, %v295, 0
      %vm360 = vcmask 1041408
      %v362 = vsel %vm360, %v308, 0
      %364 = vmatpush.bf16.msra.mxu0 0
      %365 = vmatpush.bf16.msra.mxu0 0
      %366 = vmatpush.bf16.msra.mxu0 0
      %367 = vmatpush.bf16.msra.mxu0 0
      %368 = vmatpush.bf16.msra.mxu0 0
      %369 = vmatpush.bf16.msra.mxu0 %v362
      %370 = vmatpush.bf16.msra.mxu0 %v307
      %371 = vmatpush.bf16.msra.mxu0 %v306
      %372 = vmatmul.bf16.gmra.mxu0 %v313
      %v373 = vpop.f32.mrf.mxu0
      %v374 = vadd.f32 %v214, %v373
      %v375 = vpop.f32.mrf.mxu0
      %v376 = vadd.f32 %v214, %v375
      %377 = vmatmul.bf16.gmra.mxu0 %v316
      %v378 = vpop.f32.mrf.mxu0
      %v379 = vadd.f32 %v214, %v378
      %v380 = vpop.f32.mrf.mxu0
      %v381 = vadd.f32 %v214, %v380
      %382 = vmatmul.bf16.gmra.mxu0 %v319
      %v383 = vpop.f32.mrf.mxu0
      %v384 = vadd.f32 %v214, %v383
      %v385 = vpop.f32.mrf.mxu0
      %v386 = vadd.f32 %v214, %v385
      %387 = vmatmul.bf16.gmra.mxu0 %v322
      %v388 = vpop.f32.mrf.mxu0
      %v389 = vadd.f32 %v214, %v388
      %v390 = vpop.f32.mrf.mxu0
      %v391 = vadd.f32 %v214, %v390
      %392 = vmatmul.bf16.gmra.mxu0 %v325
      %v393 = vpop.f32.mrf.mxu0
      %v394 = vadd.f32 %v214, %v393
      %v395 = vpop.f32.mrf.mxu0
      %v396 = vadd.f32 %v214, %v395
      %397 = vmatmul.bf16.gmra.mxu0 %v328
      %v398 = vpop.f32.mrf.mxu0
      %v399 = vadd.f32 %v214, %v398
      %v400 = vpop.f32.mrf.mxu0
      %v401 = vadd.f32 %v214, %v400
      %402 = vmatmul.bf16.gmra.mxu0 %v331
      %v403 = vpop.f32.mrf.mxu0
      %v404 = vadd.f32 %v214, %v403
      %v405 = vpop.f32.mrf.mxu0
      %v406 = vadd.f32 %v214, %v405
      %407 = vmatmul.bf16.gmra.mxu0 %v334
      %v408 = vpop.f32.mrf.mxu0
      %v409 = vadd.f32 %v214, %v408
      %v410 = vpop.f32.mrf.mxu0
      %v411 = vadd.f32 %v214, %v410
      %412 = vmatmul.bf16.gmra.mxu0 %v337
      %v413 = vpop.f32.mrf.mxu0
      %v414 = vadd.f32 %v214, %v413
      %v415 = vpop.f32.mrf.mxu0
      %v416 = vadd.f32 %v214, %v415
      %417 = vmatmul.bf16.gmra.mxu0 %v340
      %v418 = vpop.f32.mrf.mxu0
      %v419 = vadd.f32 %v214, %v418
      %v420 = vpop.f32.mrf.mxu0
      %v421 = vadd.f32 %v214, %v420
      %422 = vmatmul.bf16.gmra.mxu0 %v343
      %v423 = vpop.f32.mrf.mxu0
      %v424 = vadd.f32 %v214, %v423
      %v425 = vpop.f32.mrf.mxu0
      %v426 = vadd.f32 %v214, %v425
      %427 = vmatmul.bf16.gmra.mxu0 %v346
      %v428 = vpop.f32.mrf.mxu0
      %v429 = vadd.f32 %v214, %v428
      %v430 = vpop.f32.mrf.mxu0
      %v431 = vadd.f32 %v214, %v430
      %432 = vmatmul.bf16.gmra.mxu0 %v349
      %v433 = vpop.f32.mrf.mxu0
      %v434 = vadd.f32 %v214, %v433
      %v435 = vpop.f32.mrf.mxu0
      %v436 = vadd.f32 %v214, %v435
      %437 = vmatmul.bf16.gmra.mxu0 %v352
      %v438 = vpop.f32.mrf.mxu0
      %v439 = vadd.f32 %v214, %v438
      %v440 = vpop.f32.mrf.mxu0
      %v441 = vadd.f32 %v214, %v440
      %442 = vmatmul.bf16.gmra.mxu0 %v355
      %v443 = vpop.f32.mrf.mxu0
      %v444 = vadd.f32 %v214, %v443
      %v445 = vpop.f32.mrf.mxu0
      %v446 = vadd.f32 %v214, %v445
      %447 = vmatmul.bf16.gmra.mxu0 %v358
      %v448 = vpop.f32.mrf.mxu0
      %v449 = vadd.f32 %v214, %v448
      %v450 = vpop.f32.mrf.mxu0
      %v451 = vadd.f32 %v214, %v450
      %452 = vdwg.mxu0
      %v453 = vmax.f32 %v374, 0.0
      %v454 = vmax.f32 %v376, 0.0
      %v455 = vmax.f32 %v379, 0.0
      %v456 = vmax.f32 %v381, 0.0
      %v457 = vmax.f32 %v384, 0.0
      %v458 = vmax.f32 %v386, 0.0
      %v459 = vmax.f32 %v389, 0.0
      %v460 = vmax.f32 %v391, 0.0
      %v461 = vmax.f32 %v394, 0.0
      %v462 = vmax.f32 %v396, 0.0
      %v463 = vmax.f32 %v399, 0.0
      %v464 = vmax.f32 %v401, 0.0
      %v465 = vmax.f32 %v404, 0.0
      %v466 = vmax.f32 %v406, 0.0
      %v467 = vmax.f32 %v409, 0.0
      %v468 = vmax.f32 %v411, 0.0
      %v469 = vmax.f32 %v414, 0.0
      %v470 = vmax.f32 %v416, 0.0
      %v471 = vmax.f32 %v419, 0.0
      %v472 = vmax.f32 %v421, 0.0
      %v473 = vmax.f32 %v424, 0.0
      %v474 = vmax.f32 %v426, 0.0
      %v475 = vmax.f32 %v429, 0.0
      %v476 = vmax.f32 %v431, 0.0
      %v477 = vmax.f32 %v434, 0.0
      %v478 = vmax.f32 %v436, 0.0
      %v479 = vmax.f32 %v439, 0.0
      %v480 = vmax.f32 %v441, 0.0
      %v481 = vmax.f32 %v444, 0.0
      %v482 = vmax.f32 %v446, 0.0
      %v483 = vmax.f32 %v449, 0.0
      %v484 = vmax.f32 %v451, 0.0
      %v485 = vpack.c.bf16 %v453, %v453
      %v486 = vpack.c.bf16 %v454, %v454
      %v487 = vpack.c.bf16 %v455, %v455
      %v488 = vpack.c.bf16 %v456, %v456
      %v489 = vpack.c.bf16 %v457, %v457
      %v490 = vpack.c.bf16 %v458, %v458
      %v491 = vpack.c.bf16 %v459, %v459
      %v492 = vpack.c.bf16 %v460, %v460
      %v493 = vpack.c.bf16 %v461, %v461
      %v494 = vpack.c.bf16 %v462, %v462
      %v495 = vpack.c.bf16 %v463, %v463
      %v496 = vpack.c.bf16 %v464, %v464
      %v497 = vpack.c.bf16 %v465, %v465
      %v498 = vpack.c.bf16 %v466, %v466
      %v499 = vpack.c.bf16 %v467, %v467
      %v500 = vpack.c.bf16 %v468, %v468
      %v501 = vpack.c.bf16 %v469, %v469
      %v502 = vpack.c.bf16 %v470, %v470
      %v503 = vpack.c.bf16 %v471, %v471
      %v504 = vpack.c.bf16 %v472, %v472
      %v505 = vpack.c.bf16 %v473, %v473
      %v506 = vpack.c.bf16 %v474, %v474
      %v507 = vpack.c.bf16 %v475, %v475
      %v508 = vpack.c.bf16 %v476, %v476
      %v509 = vpack.c.bf16 %v477, %v477
      %v510 = vpack.c.bf16 %v478, %v478
      %v511 = vpack.c.bf16 %v479, %v479
      %v512 = vpack.c.bf16 %v480, %v480
      %v513 = vpack.c.bf16 %v481, %v481
      %v514 = vpack.c.bf16 %v482, %v482
      %v515 = vpack.c.bf16 %v483, %v483
      %v516 = vpack.c.bf16 %v484, %v484
      %517 = vst [vmem:[%s172] sm:$0xf] %v485
      %518 = vst [vmem:[%s172 + $0x4] sm:$0xf] %v486
      %519 = vst [vmem:[%s172 + $0x8] sm:$0xf] %v487
      %520 = vst [vmem:[%s172 + $0xc] sm:$0xf] %v488
      %521 = vst [vmem:[%s172 + $0x10] sm:$0xf] %v489
      %522 = vst [vmem:[%s172 + $0x14] sm:$0xf] %v490
      %523 = vst [vmem:[%s172 + $0x18] sm:$0xf] %v491
      %524 = vst [vmem:[%s172 + $0x1c] sm:$0xf] %v492
      %525 = vst [vmem:[%s172 + $0x20] sm:$0xf] %v493
      %526 = vst [vmem:[%s172 + $0x24] sm:$0xf] %v494
      %527 = vst [vmem:[%s172 + $0x28] sm:$0xf] %v495
      %528 = vst [vmem:[%s172 + $0x2c] sm:$0xf] %v496
      %529 = vst [vmem:[%s172 + $0x30] sm:$0xf] %v497
      %530 = vst [vmem:[%s172 + $0x34] sm:$0xf] %v498
      %531 = vst [vmem:[%s172 + $0x38] sm:$0xf] %v499
      %532 = vst [vmem:[%s172 + $0x3c] sm:$0xf] %v500
      %533 = vst [vmem:[%s172 + $0x40] sm:$0xf] %v501
      %534 = vst [vmem:[%s172 + $0x44] sm:$0xf] %v502
      %535 = vst [vmem:[%s172 + $0x48] sm:$0xf] %v503
      %536 = vst [vmem:[%s172 + $0x4c] sm:$0xf] %v504
      %537 = vst [vmem:[%s172 + $0x50] sm:$0xf] %v505
      %538 = vst [vmem:[%s172 + $0x54] sm:$0xf] %v506
      %539 = vst [vmem:[%s172 + $0x58] sm:$0xf] %v507
      %540 = vst [vmem:[%s172 + $0x5c] sm:$0xf] %v508
      %541 = vst [vmem:[%s172 + $0x60] sm:$0xf] %v509
      %542 = vst [vmem:[%s172 + $0x64] sm:$0xf] %v510
      %543 = vst [vmem:[%s172 + $0x68] sm:$0xf] %v511
      %544 = vst [vmem:[%s172 + $0x6c] sm:$0xf] %v512
      %545 = vst [vmem:[%s172 + $0x70] sm:$0xf] %v513
      %546 = vst [vmem:[%s172 + $0x74] sm:$0xf] %v514
      %547 = vst [vmem:[%s172 + $0x78] sm:$0xf] %v515
      %548 = vst [vmem:[%s172 + $0x7c] sm:$0xf] %v516
      %s549 = smul.u32 32, %s14
      %p550 = scmp.lt.s32.totalorder %s549, 63
      %s551 = scalar_select %p550, %s549, 63
      %s552 = smul.addr %s551, 4
      %s553 = scalar_lea.vmem %s3, %s552
      // Predicated region
      $region33: #{encoder_decoder_forward.15} parent=31 // pred_check
        %p554 = pneg %p100
      $region34: #{encoder_decoder_forward.15} parent=31 // pred_check_branch
        %556 = sbr.rel (%p554) target = $region36
      $region35: #{encoder_decoder_forward.15} parent=31 // pred_region
        %s557 = smul.u32 32, %s14
      $region36: #{encoder_decoder_forward.15} parent=31 // pred_fallthru
        _
    $region32: #{encoder_decoder_forward.15} parent=5 // pred_fallthru
      _
    %p558 = scmp.le.s32.totalorder 2, %s9
    // Predicated region
    $region37: #{encoder_decoder_forward.15} parent=5 // pred_check
      %p559 = pneg %p558
    $region38: #{encoder_decoder_forward.15} parent=5 // pred_check_branch
      %561 = sbr.rel (%p559) target = $region40
    $region39: #{encoder_decoder_forward.15} parent=5 // pred_region
      %s562 = ssub.s32 %s9, 2
      // Predicated region
      $region41: #{encoder_decoder_forward.15} parent=39 // pred_check
        %p563 = pneg %p106
      $region42: #{encoder_decoder_forward.15} parent=39 // pred_check_branch
        %565 = sbr.rel (%p563) target = $region44
      $region43: #{encoder_decoder_forward.15} parent=39 // pred_region
        %s566 = smul.u32 32, %s15
        %p567 = scmp.lt.s32.totalorder %s566, 63
        %s568 = scalar_select %p567, %s566, 63
        %s569 = smul.addr %s568, 4
        %s570 = scalar_lea.vmem %s3, %s569
      $region44: #{encoder_decoder_forward.15} parent=39 // pred_fallthru
        _
    $region40: #{encoder_decoder_forward.15} parent=5 // pred_fallthru
      _
  $region6: #{encoder_decoder_forward.15} parent=0 // loop_footer
    %s13 = sadd.s32 1, %s9
  $region7: #{encoder_decoder_forward.15} parent=0 // loop_footer_branch
    %8 = sbr.rel target = $region3
  $region8: #{encoder_decoder_forward.15} parent=0 // loop_exit
    _

</llo_original>
